<compile_context>
chip_gen: v6e
topology: v6e:2x2x1
jax: 0.10.0
libtpu: 0.0.40
codegen_flags: <defaults>
</compile_context>

<pallas_src>
import jax
import jax.numpy as jnp
from jax.experimental import pallas as pl
from jax.experimental.pallas import tpu as pltpu


def _round_up(x, m):
    return ((x + m - 1) // m) * m


# --------------------------------------------------------------------------
# Fused stack-segment kernel.
# Inputs : x, forecast_in, [x_mask, y_mask], then per block the flat list
#          [w_fc0, b_fc0, ..., w_theta, b_theta, w_basis, b_basis]
# Outputs: forecast_out, x_out    (both padded to lane-dense widths)
# --------------------------------------------------------------------------
def _make_segment_kernel(n_fcs, fpad, use_masks, compute_dtype):
    n_mask = 2 if use_masks else 0

    def kernel(*refs):
        x_ref, f_ref = refs[0], refs[1]
        if use_masks:
            xm = refs[2][...]
            ym = refs[3][...]
        param_refs = refs[2 + n_mask:-2]
        f_out_ref, x_out_ref = refs[-2], refs[-1]

        x = x_ref[...]                 # (tile_b, bpad) f32
        forecast = f_ref[...]          # (tile_b, fpad) f32

        p = 0
        for n_fc in n_fcs:             # unrolled over blocks of this segment
            h = x
            for _ in range(n_fc):
                w = param_refs[p][...]
                b = param_refs[p + 1][...]
                p += 2
                h = jnp.maximum(
                    jnp.dot(h.astype(compute_dtype), w,
                            preferred_element_type=jnp.float32) + b, 0.0)

            w_th, b_th = param_refs[p][...], param_refs[p + 1][...]; p += 2
            w_bs, b_bs = param_refs[p][...], param_refs[p + 1][...]; p += 2

            # fused theta_forecast||theta_backcast projection (one dot)
            theta = jnp.dot(h.astype(compute_dtype), w_th,
                            preferred_element_type=jnp.float32) + b_th
            # fused block-diagonal basis projection (one dot)
            fb = jnp.dot(theta.astype(compute_dtype), w_bs,
                         preferred_element_type=jnp.float32) + b_bs
            fcst = fb[:, :fpad]
            bcst = fb[:, fpad:]

            if use_masks:
                forecast = forecast + fcst * ym
                x = x - bcst * xm
            else:
                forecast = forecast + fcst
                x = x - bcst

        f_out_ref[...] = forecast
        x_out_ref[...] = x

    return kernel


def _segment_call(x_p, forecast_p, masks, seg_blocks, fpad, bpad, tile_b,
                  compute_dtype):
    use_masks = masks is not None
    n_fcs = tuple(len(blk) // 2 - 2 for blk in seg_blocks)
    flat_params = [a for blk in seg_blocks for a in blk]
    b_total = x_p.shape[0]
    grid = (b_total // tile_b,)

    batch_spec_x = pl.BlockSpec((tile_b, bpad), lambda i: (i, 0))
    batch_spec_f = pl.BlockSpec((tile_b, fpad), lambda i: (i, 0))
    const_specs = [pl.BlockSpec(a.shape, lambda i: (0, 0)) for a in flat_params]

    inputs = [x_p, forecast_p]
    in_specs = [batch_spec_x, batch_spec_f]
    if use_masks:
        inputs += list(masks)
        in_specs += [batch_spec_x, batch_spec_f]
    inputs += flat_params
    in_specs += const_specs

    out_shape = (
        jax.ShapeDtypeStruct((b_total, fpad), jnp.float32),
        jax.ShapeDtypeStruct((b_total, bpad), jnp.float32),
    )
    out_specs = (batch_spec_f, batch_spec_x)

    # Cost hint for the XLA scheduler.
    flops = 0
    for blk in seg_blocks:
        for w in blk[::2]:
            flops += 2 * b_total * w.shape[0] * w.shape[1]
    bytes_accessed = sum(int(a.size) * a.dtype.itemsize for a in inputs)
    bytes_accessed += (b_total * fpad + b_total * bpad) * 4

    # VMEM sizing (conservative; sized for the 32 MiB scoped default and the
    # tighter 64 MiB physical VMEM of v7x).
    weight_bytes = sum(int(a.size) * a.dtype.itemsize for a in flat_params)
    act_bytes = tile_b * (bpad + fpad) * 4 * (4 if use_masks else 2)
    vmem_limit = int(min(max(2 * (weight_bytes + act_bytes) + (8 << 20),
                             32 << 20), 48 << 20))

    fn = pl.pallas_call(
        _make_segment_kernel(n_fcs, fpad, use_masks, compute_dtype),
        out_shape=out_shape,
        grid=grid,
        in_specs=in_specs,
        out_specs=out_specs,
        input_output_aliases={1: 0, 0: 1},   # forecast->forecast_out, x->x_out
        compiler_params=pltpu.CompilerParams(
            dimension_semantics=("parallel",),
            vmem_limit_bytes=vmem_limit),
        cost_estimate=pl.CostEstimate(flops=flops, transcendentals=0,
                                      bytes_accessed=bytes_accessed),
    )
    return fn(*inputs)


# --------------------------------------------------------------------------
# One-time parameter preprocessing (hoisted out of the forward pass)
# --------------------------------------------------------------------------
def prepare_stack_params(raw_stack_params, forecast_len, backcast_len,
                         compute_dtype=jnp.bfloat16, lane=128):
    """Pad output feature dims to multiples of 128 (lane-dense stores), fuse
    the theta and basis projections, cast weights to `compute_dtype` (biases
    stay f32). Zero padding leaves the math unchanged."""
    fpad = _round_up(forecast_len, lane)
    bpad = _round_up(backcast_len, lane)
    blocks = []
    for params in raw_stack_params:
        n_fc = len(params) - 4
        flat = []
        for i in range(n_fc):
            w, b = params[i]
            w = w.astype(jnp.float32)
            if i == 0:  # first fc consumes the padded backcast input
                w = jnp.pad(w, ((0, bpad - w.shape[0]), (0, 0)))
            flat.append(w.astype(compute_dtype))
            flat.append(b.reshape(1, -1).astype(jnp.float32))

        (wtf, btf), (wtb, btb) = params[n_fc], params[n_fc + 1]
        (wfb, bfb), (wbb, bbb) = params[n_fc + 2], params[n_fc + 3]
        tf, tb = wtf.shape[1], wtb.shape[1]

        w_theta = jnp.concatenate([wtf, wtb], axis=1)
        b_theta = jnp.concatenate([btf, btb]).reshape(1, -1)

        w_basis = jnp.zeros((tf + tb, fpad + bpad), jnp.float32)
        w_basis = w_basis.at[:tf, :forecast_len].set(wfb)
        w_basis = w_basis.at[tf:, fpad:fpad + backcast_len].set(wbb)
        b_basis = jnp.zeros((1, fpad + bpad), jnp.float32)
        b_basis = b_basis.at[0, :forecast_len].set(bfb)
        b_basis = b_basis.at[0, fpad:fpad + backcast_len].set(bbb)

        flat.append(w_theta.astype(compute_dtype))
        flat.append(b_theta.astype(jnp.float32))
        flat.append(w_basis.astype(compute_dtype))
        flat.append(b_basis.astype(jnp.float32))
        blocks.append(flat)

    return {"blocks": blocks, "fpad": fpad, "bpad": bpad,
            "forecast_len": forecast_len, "backcast_len": backcast_len,
            "compute_dtype": compute_dtype}


# --------------------------------------------------------------------------
# Stack forward (mirrors Stack.forward)
# --------------------------------------------------------------------------
def stack_forward(prepared, x, x_mask=None, y_mask=None):
    blocks = prepared["blocks"]
    fpad, bpad = prepared["fpad"], prepared["bpad"]
    forecast_len = prepared["forecast_len"]
    backcast_len = prepared["backcast_len"]
    compute_dtype = prepared["compute_dtype"]

    batch = x.shape[0]
    tile_b = min(128, _round_up(batch, 8))
    b_pad = _round_up(batch, tile_b)

    def pad2d(a, rows, cols):
        a = a.astype(jnp.float32)
        return jnp.pad(a, ((0, rows - a.shape[0]), (0, cols - a.shape[1])))

    x_p = pad2d(x, b_pad, bpad)
    forecast_p = jnp.zeros((b_pad, fpad), jnp.float32)

    use_masks = x_mask is not None
    masks = None
    if use_masks:
        masks = (pad2d(x_mask, b_pad, bpad), pad2d(y_mask, b_pad, fpad))

    # Group blocks into segments whose fused weights fit comfortably in VMEM.
    # TODO(synk): stream weights from HBM (manual DMA) for single blocks whose
    # weights alone exceed the VMEM budget.
    budget = 10 << 20
    segments, cur, cur_bytes = [], [], 0
    for blk in blocks:
        blk_bytes = sum(int(a.size) * a.dtype.itemsize for a in blk)
        if cur and cur_bytes + blk_bytes > budget:
            segments.append(cur)
            cur, cur_bytes = [], 0
        cur.append(blk)
        cur_bytes += blk_bytes
    if cur:
        segments.append(cur)

    for seg in segments:
        forecast_p, x_p = _segment_call(x_p, forecast_p, masks, seg,
                                        fpad, bpad, tile_b, compute_dtype)

    return forecast_p[:batch, :forecast_len], x_p[:batch, :backcast_len]


# --------------------------------------------------------------------------
# Parameter construction (deterministic, PyTorch-Linear-style uniform init)
# --------------------------------------------------------------------------
def _init_linear(key, in_dim, out_dim):
    kw, kb = jax.random.split(key)
    bound = 1.0 / jnp.sqrt(jnp.float32(in_dim))
    w = jax.random.uniform(kw, (in_dim, out_dim), jnp.float32, -bound, bound)
    b = jax.random.uniform(kb, (out_dim,), jnp.float32, -bound, bound)
    return w, b


def init_block_params(key, forecast_len, backcast_len,
                      theta_forecast_dim, theta_backcast_dim, hidden_dims):
    fc_dims = [backcast_len] + list(hidden_dims)
    params = []
    n_layers = (len(fc_dims) - 1) + 4
    keys = jax.random.split(key, n_layers)
    k = 0
    for i in range(len(fc_dims) - 1):
        params.append(_init_linear(keys[k], fc_dims[i], fc_dims[i + 1])); k += 1
    params.append(_init_linear(keys[k], fc_dims[-1], theta_forecast_dim)); k += 1
    params.append(_init_linear(keys[k], fc_dims[-1], theta_backcast_dim)); k += 1
    params.append(_init_linear(keys[k], theta_forecast_dim, forecast_len)); k += 1
    params.append(_init_linear(keys[k], theta_backcast_dim, backcast_len)); k += 1
    return params


def init_stack_params(key, forecast_len, backcast_len, stack_config):
    blocks = []
    i = 0
    for block_config in stack_config["blocks"]:
        multiply = block_config.get("multiply", 1)
        for _ in range(multiply):
            bkey = jax.random.fold_in(key, i); i += 1
            blocks.append(init_block_params(
                bkey, forecast_len, backcast_len,
                block_config["theta_forecast_dim"],
                block_config["theta_backcast_dim"],
                block_config["hidden_dims"]))
    return blocks


# --------------------------------------------------------------------------
# Pure-JAX reference (optionally mirroring the kernel's low-precision casts)
# --------------------------------------------------------------------------
def _stack_ref(raw_params, forecast_len, x, x_mask, y_mask,
               compute_dtype=jnp.float32):
    cd = compute_dtype

    def dot(a, w):
        return jnp.dot(a.astype(cd), w.astype(cd),
                       preferred_element_type=jnp.float32)

    forecast = jnp.zeros((x.shape[0], forecast_len), jnp.float32)
    x = x.astype(jnp.float32)
    for params in raw_params:
        n_fc = len(params) - 4
        h = x
        for i in range(n_fc):
            w, b = params[i]
            h = jnp.maximum(dot(h, w) + b, 0.0)
        wtf, btf = params[n_fc]
        wtb, btb = params[n_fc + 1]
        wfb, bfb = params[n_fc + 2]
        wbb, bbb = params[n_fc + 3]
        theta_f = dot(h, wtf) + btf
        theta_b = dot(h, wtb) + btb
        f = dot(theta_f, wfb) + bfb
        b_ = dot(theta_b, wbb) + bbb
        if x_mask is not None:
            f = f * y_mask
            b_ = b_ * x_mask
        forecast = forecast + f
        x = x - b_
    return forecast, x


if __name__ == "__main__":
    key = jax.random.PRNGKey(0)
    k_param, k_x, k_xm, k_ym = jax.random.split(key, 4)

    batch = 2
    backcast_len = 16
    forecast_len = 8
    stack_config = {
        "blocks": [
            {"theta_forecast_dim": 8, "theta_backcast_dim": 16,
             "hidden_dims": [32, 64], "multiply": 2},
            {"theta_forecast_dim": 4, "theta_backcast_dim": 8,
             "hidden_dims": [32]},
        ]
    }

    raw_params = init_stack_params(k_param, forecast_len, backcast_len,
                                   stack_config)

    compute_dtype = jnp.bfloat16   # bf16 MXU inputs, f32 accumulation
    prepared = prepare_stack_params(raw_params, forecast_len, backcast_len,
                                    compute_dtype=compute_dtype)

    x = jax.random.normal(k_x, (batch, backcast_len), jnp.float32)
    x_mask = (jax.random.uniform(k_xm, (batch, backcast_len)) > 0.2
              ).astype(jnp.float32)
    y_mask = (jax.random.uniform(k_ym, (batch, forecast_len)) > 0.2
              ).astype(jnp.float32)

    forecast, residual = stack_forward(prepared, x, x_mask, y_mask)
    forecast = jax.block_until_ready(forecast)
    residual = jax.block_until_ready(residual)

    # Tight check against a reference using the same bf16 rounding.
    f_ref, r_ref = _stack_ref(raw_params, forecast_len, x, x_mask, y_mask,
                              compute_dtype)
    assert jnp.allclose(forecast, f_ref, atol=1e-3, rtol=1e-3)
    assert jnp.allclose(residual, r_ref, atol=1e-3, rtol=1e-3)

    # Aggregate sanity check against the full-f32 (PyTorch-semantics) reference.
    f32_f, f32_r = _stack_ref(raw_params, forecast_len, x, x_mask, y_mask,
                              jnp.float32)

    def rel_err(a, b):
        return float(jnp.linalg.norm(a - b) / (jnp.linalg.norm(b) + 1e-12))

    assert rel_err(forecast, f32_f) < 0.05
    assert rel_err(residual, f32_r) < 0.05

    print("KERNEL_OK")
</pallas_src>

<mosaic_0001>
module attributes {stable_mosaic.version = 11 : i64} {
  func.func @kernel(%arg0: i32, %arg1: memref<8x128xf32, #tpu.memory_space<vmem>>, %arg2: memref<8x128xf32, #tpu.memory_space<vmem>>, %arg3: memref<8x128xf32, #tpu.memory_space<vmem>>, %arg4: memref<8x128xf32, #tpu.memory_space<vmem>>, %arg5: memref<128x32xbf16, #tpu.memory_space<vmem>>, %arg6: memref<1x32xf32, #tpu.memory_space<vmem>>, %arg7: memref<32x64xbf16, #tpu.memory_space<vmem>>, %arg8: memref<1x64xf32, #tpu.memory_space<vmem>>, %arg9: memref<64x24xbf16, #tpu.memory_space<vmem>>, %arg10: memref<1x24xf32, #tpu.memory_space<vmem>>, %arg11: memref<24x256xbf16, #tpu.memory_space<vmem>>, %arg12: memref<1x256xf32, #tpu.memory_space<vmem>>, %arg13: memref<128x32xbf16, #tpu.memory_space<vmem>>, %arg14: memref<1x32xf32, #tpu.memory_space<vmem>>, %arg15: memref<32x64xbf16, #tpu.memory_space<vmem>>, %arg16: memref<1x64xf32, #tpu.memory_space<vmem>>, %arg17: memref<64x24xbf16, #tpu.memory_space<vmem>>, %arg18: memref<1x24xf32, #tpu.memory_space<vmem>>, %arg19: memref<24x256xbf16, #tpu.memory_space<vmem>>, %arg20: memref<1x256xf32, #tpu.memory_space<vmem>>, %arg21: memref<128x32xbf16, #tpu.memory_space<vmem>>, %arg22: memref<1x32xf32, #tpu.memory_space<vmem>>, %arg23: memref<32x12xbf16, #tpu.memory_space<vmem>>, %arg24: memref<1x12xf32, #tpu.memory_space<vmem>>, %arg25: memref<12x256xbf16, #tpu.memory_space<vmem>>, %arg26: memref<1x256xf32, #tpu.memory_space<vmem>>, %arg27: memref<8x128xf32, #tpu.memory_space<vmem>>, %arg28: memref<8x128xf32, #tpu.memory_space<vmem>>) attributes {dimension_semantics = [#tpu.dimension_semantics<parallel>], iteration_bounds = array<i64: 1>, scalar_prefetch = 0 : i64, scratch_operands = 0 : i64, tpu.core_type = #tpu.core_type<tc>, window_params = [{transform_indices = @transform_0, window_bounds = array<i64: 8, 128>}, {transform_indices = @transform_1, window_bounds = array<i64: 8, 128>}, {transform_indices = @transform_2, window_bounds = array<i64: 8, 128>}, {transform_indices = @transform_3, window_bounds = array<i64: 8, 128>}, {pipeline_mode = #tpu.pipeline_mode<synchronous>, transform_indices = @transform_4, window_bounds = array<i64: 128, 32>}, {pipeline_mode = #tpu.pipeline_mode<synchronous>, transform_indices = @transform_5, window_bounds = array<i64: 1, 32>}, {pipeline_mode = #tpu.pipeline_mode<synchronous>, transform_indices = @transform_6, window_bounds = array<i64: 32, 64>}, {pipeline_mode = #tpu.pipeline_mode<synchronous>, transform_indices = @transform_7, window_bounds = array<i64: 1, 64>}, {pipeline_mode = #tpu.pipeline_mode<synchronous>, transform_indices = @transform_8, window_bounds = array<i64: 64, 24>}, {pipeline_mode = #tpu.pipeline_mode<synchronous>, transform_indices = @transform_9, window_bounds = array<i64: 1, 24>}, {pipeline_mode = #tpu.pipeline_mode<synchronous>, transform_indices = @transform_10, window_bounds = array<i64: 24, 256>}, {pipeline_mode = #tpu.pipeline_mode<synchronous>, transform_indices = @transform_11, window_bounds = array<i64: 1, 256>}, {pipeline_mode = #tpu.pipeline_mode<synchronous>, transform_indices = @transform_12, window_bounds = array<i64: 128, 32>}, {pipeline_mode = #tpu.pipeline_mode<synchronous>, transform_indices = @transform_13, window_bounds = array<i64: 1, 32>}, {pipeline_mode = #tpu.pipeline_mode<synchronous>, transform_indices = @transform_14, window_bounds = array<i64: 32, 64>}, {pipeline_mode = #tpu.pipeline_mode<synchronous>, transform_indices = @transform_15, window_bounds = array<i64: 1, 64>}, {pipeline_mode = #tpu.pipeline_mode<synchronous>, transform_indices = @transform_16, window_bounds = array<i64: 64, 24>}, {pipeline_mode = #tpu.pipeline_mode<synchronous>, transform_indices = @transform_17, window_bounds = array<i64: 1, 24>}, {pipeline_mode = #tpu.pipeline_mode<synchronous>, transform_indices = @transform_18, window_bounds = array<i64: 24, 256>}, {pipeline_mode = #tpu.pipeline_mode<synchronous>, transform_indices = @transform_19, window_bounds = array<i64: 1, 256>}, {pipeline_mode = #tpu.pipeline_mode<synchronous>, transform_indices = @transform_20, window_bounds = array<i64: 128, 32>}, {pipeline_mode = #tpu.pipeline_mode<synchronous>, transform_indices = @transform_21, window_bounds = array<i64: 1, 32>}, {pipeline_mode = #tpu.pipeline_mode<synchronous>, transform_indices = @transform_22, window_bounds = array<i64: 32, 12>}, {pipeline_mode = #tpu.pipeline_mode<synchronous>, transform_indices = @transform_23, window_bounds = array<i64: 1, 12>}, {pipeline_mode = #tpu.pipeline_mode<synchronous>, transform_indices = @transform_24, window_bounds = array<i64: 12, 256>}, {pipeline_mode = #tpu.pipeline_mode<synchronous>, transform_indices = @transform_25, window_bounds = array<i64: 1, 256>}, {transform_indices = @transform_26, window_bounds = array<i64: 8, 128>}, {transform_indices = @transform_27, window_bounds = array<i64: 8, 128>}]} {
    %c0 = arith.constant 0 : index
    %c0_0 = arith.constant 0 : index
    %0 = vector.load %arg3[%c0, %c0_0] : memref<8x128xf32, #tpu.memory_space<vmem>>, vector<8x128xf32>
    %c0_1 = arith.constant 0 : index
    %c0_2 = arith.constant 0 : index
    %1 = vector.load %arg4[%c0_1, %c0_2] : memref<8x128xf32, #tpu.memory_space<vmem>>, vector<8x128xf32>
    %c0_3 = arith.constant 0 : index
    %c0_4 = arith.constant 0 : index
    %2 = vector.load %arg1[%c0_3, %c0_4] : memref<8x128xf32, #tpu.memory_space<vmem>>, vector<8x128xf32>
    %c0_5 = arith.constant 0 : index
    %c0_6 = arith.constant 0 : index
    %3 = vector.load %arg2[%c0_5, %c0_6] : memref<8x128xf32, #tpu.memory_space<vmem>>, vector<8x128xf32>
    %c0_7 = arith.constant 0 : index
    %c0_8 = arith.constant 0 : index
    %4 = vector.load %arg5[%c0_7, %c0_8] : memref<128x32xbf16, #tpu.memory_space<vmem>>, vector<128x32xbf16>
    %c0_9 = arith.constant 0 : index
    %c0_10 = arith.constant 0 : index
    %5 = vector.load %arg6[%c0_9, %c0_10] : memref<1x32xf32, #tpu.memory_space<vmem>>, vector<1x32xf32>
    %6 = arith.truncf %2 : vector<8x128xf32> to vector<8x128xbf16>
    %cst = arith.constant dense<0.000000e+00> : vector<8x32xf32>
    %7 = tpu.matmul %6, %4, %cst {dimension_numbers = #tpu.dot_dimension_numbers<[1], [0], [0], [1], [0, 0, 1, 1], [], []>} : vector<8x128xbf16>, vector<128x32xbf16>, vector<8x32xf32> -> vector<8x32xf32>
    %8 = vector.broadcast %5 : vector<1x32xf32> to vector<8x32xf32>
    %9 = arith.addf %7, %8 : vector<8x32xf32>
    %cst_11 = arith.constant 0.000000e+00 : f32
    %10 = vector.broadcast %cst_11 : f32 to vector<8x32xf32>
    %11 = arith.maximumf %9, %10 : vector<8x32xf32>
    %c0_12 = arith.constant 0 : index
    %c0_13 = arith.constant 0 : index
    %12 = vector.load %arg7[%c0_12, %c0_13] : memref<32x64xbf16, #tpu.memory_space<vmem>>, vector<32x64xbf16>
    %c0_14 = arith.constant 0 : index
    %c0_15 = arith.constant 0 : index
    %13 = vector.load %arg8[%c0_14, %c0_15] : memref<1x64xf32, #tpu.memory_space<vmem>>, vector<1x64xf32>
    %14 = arith.truncf %11 : vector<8x32xf32> to vector<8x32xbf16>
    %cst_16 = arith.constant dense<0.000000e+00> : vector<8x64xf32>
    %15 = tpu.matmul %14, %12, %cst_16 {dimension_numbers = #tpu.dot_dimension_numbers<[1], [0], [0], [1], [0, 0, 1, 1], [], []>} : vector<8x32xbf16>, vector<32x64xbf16>, vector<8x64xf32> -> vector<8x64xf32>
    %16 = vector.broadcast %13 : vector<1x64xf32> to vector<8x64xf32>
    %17 = arith.addf %15, %16 : vector<8x64xf32>
    %cst_17 = arith.constant 0.000000e+00 : f32
    %18 = vector.broadcast %cst_17 : f32 to vector<8x64xf32>
    %19 = arith.maximumf %17, %18 : vector<8x64xf32>
    %c0_18 = arith.constant 0 : index
    %c0_19 = arith.constant 0 : index
    %20 = vector.load %arg9[%c0_18, %c0_19] : memref<64x24xbf16, #tpu.memory_space<vmem>>, vector<64x24xbf16>
    %c0_20 = arith.constant 0 : index
    %c0_21 = arith.constant 0 : index
    %21 = vector.load %arg10[%c0_20, %c0_21] : memref<1x24xf32, #tpu.memory_space<vmem>>, vector<1x24xf32>
    %c0_22 = arith.constant 0 : index
    %c0_23 = arith.constant 0 : index
    %22 = vector.load %arg11[%c0_22, %c0_23] : memref<24x256xbf16, #tpu.memory_space<vmem>>, vector<24x256xbf16>
    %c0_24 = arith.constant 0 : index
    %c0_25 = arith.constant 0 : index
    %23 = vector.load %arg12[%c0_24, %c0_25] : memref<1x256xf32, #tpu.memory_space<vmem>>, vector<1x256xf32>
    %24 = arith.truncf %19 : vector<8x64xf32> to vector<8x64xbf16>
    %cst_26 = arith.constant dense<0.000000e+00> : vector<8x24xf32>
    %25 = tpu.matmul %24, %20, %cst_26 {dimension_numbers = #tpu.dot_dimension_numbers<[1], [0], [0], [1], [0, 0, 1, 1], [], []>} : vector<8x64xbf16>, vector<64x24xbf16>, vector<8x24xf32> -> vector<8x24xf32>
    %26 = vector.broadcast %21 : vector<1x24xf32> to vector<8x24xf32>
    %27 = arith.addf %25, %26 : vector<8x24xf32>
    %28 = arith.truncf %27 : vector<8x24xf32> to vector<8x24xbf16>
    %cst_27 = arith.constant dense<0.000000e+00> : vector<8x256xf32>
    %29 = tpu.matmul %28, %22, %cst_27 {dimension_numbers = #tpu.dot_dimension_numbers<[1], [0], [0], [1], [0, 0, 1, 1], [], []>} : vector<8x24xbf16>, vector<24x256xbf16>, vector<8x256xf32> -> vector<8x256xf32>
    %30 = vector.broadcast %23 : vector<1x256xf32> to vector<8x256xf32>
    %31 = arith.addf %29, %30 : vector<8x256xf32>
    %32 = vector.extract_strided_slice %31 {offsets = [0, 0], sizes = [8, 128], strides = [1, 1]} : vector<8x256xf32> to vector<8x128xf32>
    %33 = vector.extract_strided_slice %31 {offsets = [0, 128], sizes = [8, 128], strides = [1, 1]} : vector<8x256xf32> to vector<8x128xf32>
    %34 = arith.mulf %32, %1 : vector<8x128xf32>
    %35 = arith.addf %3, %34 : vector<8x128xf32>
    %36 = arith.mulf %33, %0 : vector<8x128xf32>
    %37 = arith.subf %2, %36 : vector<8x128xf32>
    %c0_28 = arith.constant 0 : index
    %c0_29 = arith.constant 0 : index
    %38 = vector.load %arg13[%c0_28, %c0_29] : memref<128x32xbf16, #tpu.memory_space<vmem>>, vector<128x32xbf16>
    %c0_30 = arith.constant 0 : index
    %c0_31 = arith.constant 0 : index
    %39 = vector.load %arg14[%c0_30, %c0_31] : memref<1x32xf32, #tpu.memory_space<vmem>>, vector<1x32xf32>
    %40 = arith.truncf %37 : vector<8x128xf32> to vector<8x128xbf16>
    %cst_32 = arith.constant dense<0.000000e+00> : vector<8x32xf32>
    %41 = tpu.matmul %40, %38, %cst_32 {dimension_numbers = #tpu.dot_dimension_numbers<[1], [0], [0], [1], [0, 0, 1, 1], [], []>} : vector<8x128xbf16>, vector<128x32xbf16>, vector<8x32xf32> -> vector<8x32xf32>
    %42 = vector.broadcast %39 : vector<1x32xf32> to vector<8x32xf32>
    %43 = arith.addf %41, %42 : vector<8x32xf32>
    %cst_33 = arith.constant 0.000000e+00 : f32
    %44 = vector.broadcast %cst_33 : f32 to vector<8x32xf32>
    %45 = arith.maximumf %43, %44 : vector<8x32xf32>
    %c0_34 = arith.constant 0 : index
    %c0_35 = arith.constant 0 : index
    %46 = vector.load %arg15[%c0_34, %c0_35] : memref<32x64xbf16, #tpu.memory_space<vmem>>, vector<32x64xbf16>
    %c0_36 = arith.constant 0 : index
    %c0_37 = arith.constant 0 : index
    %47 = vector.load %arg16[%c0_36, %c0_37] : memref<1x64xf32, #tpu.memory_space<vmem>>, vector<1x64xf32>
    %48 = arith.truncf %45 : vector<8x32xf32> to vector<8x32xbf16>
    %cst_38 = arith.constant dense<0.000000e+00> : vector<8x64xf32>
    %49 = tpu.matmul %48, %46, %cst_38 {dimension_numbers = #tpu.dot_dimension_numbers<[1], [0], [0], [1], [0, 0, 1, 1], [], []>} : vector<8x32xbf16>, vector<32x64xbf16>, vector<8x64xf32> -> vector<8x64xf32>
    %50 = vector.broadcast %47 : vector<1x64xf32> to vector<8x64xf32>
    %51 = arith.addf %49, %50 : vector<8x64xf32>
    %cst_39 = arith.constant 0.000000e+00 : f32
    %52 = vector.broadcast %cst_39 : f32 to vector<8x64xf32>
    %53 = arith.maximumf %51, %52 : vector<8x64xf32>
    %c0_40 = arith.constant 0 : index
    %c0_41 = arith.constant 0 : index
    %54 = vector.load %arg17[%c0_40, %c0_41] : memref<64x24xbf16, #tpu.memory_space<vmem>>, vector<64x24xbf16>
    %c0_42 = arith.constant 0 : index
    %c0_43 = arith.constant 0 : index
    %55 = vector.load %arg18[%c0_42, %c0_43] : memref<1x24xf32, #tpu.memory_space<vmem>>, vector<1x24xf32>
    %c0_44 = arith.constant 0 : index
    %c0_45 = arith.constant 0 : index
    %56 = vector.load %arg19[%c0_44, %c0_45] : memref<24x256xbf16, #tpu.memory_space<vmem>>, vector<24x256xbf16>
    %c0_46 = arith.constant 0 : index
    %c0_47 = arith.constant 0 : index
    %57 = vector.load %arg20[%c0_46, %c0_47] : memref<1x256xf32, #tpu.memory_space<vmem>>, vector<1x256xf32>
    %58 = arith.truncf %53 : vector<8x64xf32> to vector<8x64xbf16>
    %cst_48 = arith.constant dense<0.000000e+00> : vector<8x24xf32>
    %59 = tpu.matmul %58, %54, %cst_48 {dimension_numbers = #tpu.dot_dimension_numbers<[1], [0], [0], [1], [0, 0, 1, 1], [], []>} : vector<8x64xbf16>, vector<64x24xbf16>, vector<8x24xf32> -> vector<8x24xf32>
    %60 = vector.broadcast %55 : vector<1x24xf32> to vector<8x24xf32>
    %61 = arith.addf %59, %60 : vector<8x24xf32>
    %62 = arith.truncf %61 : vector<8x24xf32> to vector<8x24xbf16>
    %cst_49 = arith.constant dense<0.000000e+00> : vector<8x256xf32>
    %63 = tpu.matmul %62, %56, %cst_49 {dimension_numbers = #tpu.dot_dimension_numbers<[1], [0], [0], [1], [0, 0, 1, 1], [], []>} : vector<8x24xbf16>, vector<24x256xbf16>, vector<8x256xf32> -> vector<8x256xf32>
    %64 = vector.broadcast %57 : vector<1x256xf32> to vector<8x256xf32>
    %65 = arith.addf %63, %64 : vector<8x256xf32>
    %66 = vector.extract_strided_slice %65 {offsets = [0, 0], sizes = [8, 128], strides = [1, 1]} : vector<8x256xf32> to vector<8x128xf32>
    %67 = vector.extract_strided_slice %65 {offsets = [0, 128], sizes = [8, 128], strides = [1, 1]} : vector<8x256xf32> to vector<8x128xf32>
    %68 = arith.mulf %66, %1 : vector<8x128xf32>
    %69 = arith.addf %35, %68 : vector<8x128xf32>
    %70 = arith.mulf %67, %0 : vector<8x128xf32>
    %71 = arith.subf %37, %70 : vector<8x128xf32>
    %c0_50 = arith.constant 0 : index
    %c0_51 = arith.constant 0 : index
    %72 = vector.load %arg21[%c0_50, %c0_51] : memref<128x32xbf16, #tpu.memory_space<vmem>>, vector<128x32xbf16>
    %c0_52 = arith.constant 0 : index
    %c0_53 = arith.constant 0 : index
    %73 = vector.load %arg22[%c0_52, %c0_53] : memref<1x32xf32, #tpu.memory_space<vmem>>, vector<1x32xf32>
    %74 = arith.truncf %71 : vector<8x128xf32> to vector<8x128xbf16>
    %cst_54 = arith.constant dense<0.000000e+00> : vector<8x32xf32>
    %75 = tpu.matmul %74, %72, %cst_54 {dimension_numbers = #tpu.dot_dimension_numbers<[1], [0], [0], [1], [0, 0, 1, 1], [], []>} : vector<8x128xbf16>, vector<128x32xbf16>, vector<8x32xf32> -> vector<8x32xf32>
    %76 = vector.broadcast %73 : vector<1x32xf32> to vector<8x32xf32>
    %77 = arith.addf %75, %76 : vector<8x32xf32>
    %cst_55 = arith.constant 0.000000e+00 : f32
    %78 = vector.broadcast %cst_55 : f32 to vector<8x32xf32>
    %79 = arith.maximumf %77, %78 : vector<8x32xf32>
    %c0_56 = arith.constant 0 : index
    %c0_57 = arith.constant 0 : index
    %80 = vector.load %arg23[%c0_56, %c0_57] : memref<32x12xbf16, #tpu.memory_space<vmem>>, vector<32x12xbf16>
    %c0_58 = arith.constant 0 : index
    %c0_59 = arith.constant 0 : index
    %81 = vector.load %arg24[%c0_58, %c0_59] : memref<1x12xf32, #tpu.memory_space<vmem>>, vector<1x12xf32>
    %c0_60 = arith.constant 0 : index
    %c0_61 = arith.constant 0 : index
    %82 = vector.load %arg25[%c0_60, %c0_61] : memref<12x256xbf16, #tpu.memory_space<vmem>>, vector<12x256xbf16>
    %c0_62 = arith.constant 0 : index
    %c0_63 = arith.constant 0 : index
    %83 = vector.load %arg26[%c0_62, %c0_63] : memref<1x256xf32, #tpu.memory_space<vmem>>, vector<1x256xf32>
    %84 = arith.truncf %79 : vector<8x32xf32> to vector<8x32xbf16>
    %cst_64 = arith.constant dense<0.000000e+00> : vector<8x12xf32>
    %85 = tpu.matmul %84, %80, %cst_64 {dimension_numbers = #tpu.dot_dimension_numbers<[1], [0], [0], [1], [0, 0, 1, 1], [], []>} : vector<8x32xbf16>, vector<32x12xbf16>, vector<8x12xf32> -> vector<8x12xf32>
    %86 = vector.broadcast %81 : vector<1x12xf32> to vector<8x12xf32>
    %87 = arith.addf %85, %86 : vector<8x12xf32>
    %88 = arith.truncf %87 : vector<8x12xf32> to vector<8x12xbf16>
    %cst_65 = arith.constant dense<0.000000e+00> : vector<8x256xf32>
    %89 = tpu.matmul %88, %82, %cst_65 {dimension_numbers = #tpu.dot_dimension_numbers<[1], [0], [0], [1], [0, 0, 1, 1], [], []>} : vector<8x12xbf16>, vector<12x256xbf16>, vector<8x256xf32> -> vector<8x256xf32>
    %90 = vector.broadcast %83 : vector<1x256xf32> to vector<8x256xf32>
    %91 = arith.addf %89, %90 : vector<8x256xf32>
    %92 = vector.extract_strided_slice %91 {offsets = [0, 0], sizes = [8, 128], strides = [1, 1]} : vector<8x256xf32> to vector<8x128xf32>
    %93 = vector.extract_strided_slice %91 {offsets = [0, 128], sizes = [8, 128], strides = [1, 1]} : vector<8x256xf32> to vector<8x128xf32>
    %94 = arith.mulf %92, %1 : vector<8x128xf32>
    %95 = arith.addf %69, %94 : vector<8x128xf32>
    %96 = arith.mulf %93, %0 : vector<8x128xf32>
    %97 = arith.subf %71, %96 : vector<8x128xf32>
    %c0_66 = arith.constant 0 : index
    %c0_67 = arith.constant 0 : index
    %98 = vector.load %arg27[%c0_66, %c0_67] : memref<8x128xf32, #tpu.memory_space<vmem>>, vector<8x128xf32>
    tpu.vector_store %arg27[%c0_66, %c0_67], %95 {strides = array<i32>} : memref<8x128xf32, #tpu.memory_space<vmem>>, vector<8x128xf32>,
    %c0_68 = arith.constant 0 : index
    %c0_69 = arith.constant 0 : index
    %99 = vector.load %arg28[%c0_68, %c0_69] : memref<8x128xf32, #tpu.memory_space<vmem>>, vector<8x128xf32>
    tpu.vector_store %arg28[%c0_68, %c0_69], %97 {strides = array<i32>} : memref<8x128xf32, #tpu.memory_space<vmem>>, vector<8x128xf32>,
    return
  }
  func.func @transform_0(%arg0: i32) -> (i32, i32) {
    %c0_i32 = arith.constant 0 : i32
    %c0_i32_0 = arith.constant 0 : i32
    return %arg0, %c0_i32 : i32, i32
  }
  func.func @transform_1(%arg0: i32) -> (i32, i32) {
    %c0_i32 = arith.constant 0 : i32
    %c0_i32_0 = arith.constant 0 : i32
    return %arg0, %c0_i32 : i32, i32
  }
  func.func @transform_2(%arg0: i32) -> (i32, i32) {
    %c0_i32 = arith.constant 0 : i32
    %c0_i32_0 = arith.constant 0 : i32
    return %arg0, %c0_i32 : i32, i32
  }
  func.func @transform_3(%arg0: i32) -> (i32, i32) {
    %c0_i32 = arith.constant 0 : i32
    %c0_i32_0 = arith.constant 0 : i32
    return %arg0, %c0_i32 : i32, i32
  }
  func.func @transform_4(%arg0: i32) -> (i32, i32) {
    %c0_i32 = arith.constant 0 : i32
    %c0_i32_0 = arith.constant 0 : i32
    %c0_i32_1 = arith.constant 0 : i32
    return %c0_i32, %c0_i32_0 : i32, i32
  }
  func.func @transform_5(%arg0: i32) -> (i32, i32) {
    %c0_i32 = arith.constant 0 : i32
    %c0_i32_0 = arith.constant 0 : i32
    %c0_i32_1 = arith.constant 0 : i32
    return %c0_i32, %c0_i32_0 : i32, i32
  }
  func.func @transform_6(%arg0: i32) -> (i32, i32) {
    %c0_i32 = arith.constant 0 : i32
    %c0_i32_0 = arith.constant 0 : i32
    %c0_i32_1 = arith.constant 0 : i32
    return %c0_i32, %c0_i32_0 : i32, i32
  }
  func.func @transform_7(%arg0: i32) -> (i32, i32) {
    %c0_i32 = arith.constant 0 : i32
    %c0_i32_0 = arith.constant 0 : i32
    %c0_i32_1 = arith.constant 0 : i32
    return %c0_i32, %c0_i32_0 : i32, i32
  }
  func.func @transform_8(%arg0: i32) -> (i32, i32) {
    %c0_i32 = arith.constant 0 : i32
    %c0_i32_0 = arith.constant 0 : i32
    %c0_i32_1 = arith.constant 0 : i32
    return %c0_i32, %c0_i32_0 : i32, i32
  }
  func.func @transform_9(%arg0: i32) -> (i32, i32) {
    %c0_i32 = arith.constant 0 : i32
    %c0_i32_0 = arith.constant 0 : i32
    %c0_i32_1 = arith.constant 0 : i32
    return %c0_i32, %c0_i32_0 : i32, i32
  }
  func.func @transform_10(%arg0: i32) -> (i32, i32) {
    %c0_i32 = arith.constant 0 : i32
    %c0_i32_0 = arith.constant 0 : i32
    %c0_i32_1 = arith.constant 0 : i32
    return %c0_i32, %c0_i32_0 : i32, i32
  }
  func.func @transform_11(%arg0: i32) -> (i32, i32) {
    %c0_i32 = arith.constant 0 : i32
    %c0_i32_0 = arith.constant 0 : i32
    %c0_i32_1 = arith.constant 0 : i32
    return %c0_i32, %c0_i32_0 : i32, i32
  }
  func.func @transform_12(%arg0: i32) -> (i32, i32) {
    %c0_i32 = arith.constant 0 : i32
    %c0_i32_0 = arith.constant 0 : i32
    %c0_i32_1 = arith.constant 0 : i32
    return %c0_i32, %c0_i32_0 : i32, i32
  }
  func.func @transform_13(%arg0: i32) -> (i32, i32) {
    %c0_i32 = arith.constant 0 : i32
    %c0_i32_0 = arith.constant 0 : i32
    %c0_i32_1 = arith.constant 0 : i32
    return %c0_i32, %c0_i32_0 : i32, i32
  }
  func.func @transform_14(%arg0: i32) -> (i32, i32) {
    %c0_i32 = arith.constant 0 : i32
    %c0_i32_0 = arith.constant 0 : i32
    %c0_i32_1 = arith.constant 0 : i32
    return %c0_i32, %c0_i32_0 : i32, i32
  }
  func.func @transform_15(%arg0: i32) -> (i32, i32) {
    %c0_i32 = arith.constant 0 : i32
    %c0_i32_0 = arith.constant 0 : i32
    %c0_i32_1 = arith.constant 0 : i32
    return %c0_i32, %c0_i32_0 : i32, i32
  }
  func.func @transform_16(%arg0: i32) -> (i32, i32) {
    %c0_i32 = arith.constant 0 : i32
    %c0_i32_0 = arith.constant 0 : i32
    %c0_i32_1 = arith.constant 0 : i32
    return %c0_i32, %c0_i32_0 : i32, i32
  }
  func.func @transform_17(%arg0: i32) -> (i32, i32) {
    %c0_i32 = arith.constant 0 : i32
    %c0_i32_0 = arith.constant 0 : i32
    %c0_i32_1 = arith.constant 0 : i32
    return %c0_i32, %c0_i32_0 : i32, i32
  }
  func.func @transform_18(%arg0: i32) -> (i32, i32) {
    %c0_i32 = arith.constant 0 : i32
    %c0_i32_0 = arith.constant 0 : i32
    %c0_i32_1 = arith.constant 0 : i32
    return %c0_i32, %c0_i32_0 : i32, i32
  }
  func.func @transform_19(%arg0: i32) -> (i32, i32) {
    %c0_i32 = arith.constant 0 : i32
    %c0_i32_0 = arith.constant 0 : i32
    %c0_i32_1 = arith.constant 0 : i32
    return %c0_i32, %c0_i32_0 : i32, i32
  }
  func.func @transform_20(%arg0: i32) -> (i32, i32) {
    %c0_i32 = arith.constant 0 : i32
    %c0_i32_0 = arith.constant 0 : i32
    %c0_i32_1 = arith.constant 0 : i32
    return %c0_i32, %c0_i32_0 : i32, i32
  }
  func.func @transform_21(%arg0: i32) -> (i32, i32) {
    %c0_i32 = arith.constant 0 : i32
    %c0_i32_0 = arith.constant 0 : i32
    %c0_i32_1 = arith.constant 0 : i32
    return %c0_i32, %c0_i32_0 : i32, i32
  }
  func.func @transform_22(%arg0: i32) -> (i32, i32) {
    %c0_i32 = arith.constant 0 : i32
    %c0_i32_0 = arith.constant 0 : i32
    %c0_i32_1 = arith.constant 0 : i32
    return %c0_i32, %c0_i32_0 : i32, i32
  }
  func.func @transform_23(%arg0: i32) -> (i32, i32) {
    %c0_i32 = arith.constant 0 : i32
    %c0_i32_0 = arith.constant 0 : i32
    %c0_i32_1 = arith.constant 0 : i32
    return %c0_i32, %c0_i32_0 : i32, i32
  }
  func.func @transform_24(%arg0: i32) -> (i32, i32) {
    %c0_i32 = arith.constant 0 : i32
    %c0_i32_0 = arith.constant 0 : i32
    %c0_i32_1 = arith.constant 0 : i32
    return %c0_i32, %c0_i32_0 : i32, i32
  }
  func.func @transform_25(%arg0: i32) -> (i32, i32) {
    %c0_i32 = arith.constant 0 : i32
    %c0_i32_0 = arith.constant 0 : i32
    %c0_i32_1 = arith.constant 0 : i32
    return %c0_i32, %c0_i32_0 : i32, i32
  }
  func.func @transform_26(%arg0: i32) -> (i32, i32) {
    %c0_i32 = arith.constant 0 : i32
    %c0_i32_0 = arith.constant 0 : i32
    return %arg0, %c0_i32 : i32, i32
  }
  func.func @transform_27(%arg0: i32) -> (i32, i32) {
    %c0_i32 = arith.constant 0 : i32
    %c0_i32_0 = arith.constant 0 : i32
    return %arg0, %c0_i32 : i32, i32
  }
}

</mosaic_0001>

<llo_original>
// kernel: tpu_custom_call.1
$region0: #{tpu_custom_call.1}
  #allocation0 [shape = 'u32[]', space=smem, size = 0x4, offset = 0x4, fixed_abs, tag = 'smem constant byte address 0x4 - core index']
  #allocation1 [shape = 'u32[144,128]{1,0:T(1,128)}', space=vmem, size = 0x12000, scoped, tag = 'internal scratch']
  %s0 = inlined_call_operand.hbm [shape: f32[8,128], index: 0, kind: input, shape index: {}, may-alias: {0,27}]
  %s1 = inlined_call_operand.hbm [shape: f32[8,128], index: 1, kind: input, shape index: {}, may-alias: {1,26}]
  %s2 = inlined_call_operand.vmem [shape: f32[8,128], index: 2, kind: input, shape index: {}]
  %s3 = inlined_call_operand.vmem [shape: f32[8,128], index: 3, kind: input, shape index: {}]
  %s4 = inlined_call_operand.vmem [shape: bf16[128,32], index: 4, kind: input, shape index: {}]
  %s5 = inlined_call_operand.vmem [shape: f32[1,32], index: 5, kind: input, shape index: {}]
  %s6 = inlined_call_operand.vmem [shape: bf16[32,64], index: 6, kind: input, shape index: {}]
  %s7 = inlined_call_operand.vmem [shape: f32[1,64], index: 7, kind: input, shape index: {}]
  %s8 = inlined_call_operand.vmem [shape: bf16[64,24], index: 8, kind: input, shape index: {}]
  %s9 = inlined_call_operand.vmem [shape: f32[1,24], index: 9, kind: input, shape index: {}]
  %s10 = inlined_call_operand.vmem [shape: bf16[24,256], index: 10, kind: input, shape index: {}]
  %s11 = inlined_call_operand.vmem [shape: f32[1,256], index: 11, kind: input, shape index: {}]
  %s12 = inlined_call_operand.vmem [shape: bf16[128,32], index: 12, kind: input, shape index: {}]
  %s13 = inlined_call_operand.vmem [shape: f32[1,32], index: 13, kind: input, shape index: {}]
  %s14 = inlined_call_operand.vmem [shape: bf16[32,64], index: 14, kind: input, shape index: {}]
  %s15 = inlined_call_operand.vmem [shape: f32[1,64], index: 15, kind: input, shape index: {}]
  %s16 = inlined_call_operand.vmem [shape: bf16[64,24], index: 16, kind: input, shape index: {}]
  %s17 = inlined_call_operand.vmem [shape: f32[1,24], index: 17, kind: input, shape index: {}]
  %s18 = inlined_call_operand.vmem [shape: bf16[24,256], index: 18, kind: input, shape index: {}]
  %s19 = inlined_call_operand.vmem [shape: f32[1,256], index: 19, kind: input, shape index: {}]
  %s20 = inlined_call_operand.vmem [shape: bf16[128,32], index: 20, kind: input, shape index: {}]
  %s21 = inlined_call_operand.vmem [shape: f32[1,32], index: 21, kind: input, shape index: {}]
  %s22 = inlined_call_operand.vmem [shape: bf16[32,12], index: 22, kind: input, shape index: {}]
  %s23 = inlined_call_operand.vmem [shape: f32[1,12], index: 23, kind: input, shape index: {}]
  %s24 = inlined_call_operand.vmem [shape: bf16[12,256], index: 24, kind: input, shape index: {}]
  %s25 = inlined_call_operand.vmem [shape: f32[1,256], index: 25, kind: input, shape index: {}]
  %s26 = inlined_call_operand.hbm [shape: f32[8,128], index: 26, kind: output, shape index: {0}, may-alias: {1,26}]
  %s27 = inlined_call_operand.hbm [shape: f32[8,128], index: 27, kind: output, shape index: {1}, may-alias: {0,27}]
  %28 = xla_tuple %s26, %s27
  %s29 = sld [smem:[#allocation0]]
  $region130: #{tpu_custom_call.1} parent=0
    _
  %s31 = ssub.s32 1, %s29
  %s32 = scalar_select 0, %s31, %s29
  $region1: #{tpu_custom_call.1} parent=0
    #allocation2 [shape = 'u8[4096]{0}', space=vmem, size = 0x1000, scoped, tag = 'input window, operand 0, single buffered']
    #allocation3 [shape = 's32[1]{0}', space=sflag, size = 0x4, scoped, tag = 'scoped memory for tpu_custom_call.1']
    #allocation4 [shape = 's32[1]{0}', space=sflag, size = 0x4, scoped, tag = 'scoped memory for tpu_custom_call.1']
    #allocation5 [shape = 'u8[4096]{0}', space=vmem, size = 0x1000, scoped, tag = 'input window, operand 1, single buffered']
    #allocation6 [shape = 's32[1]{0}', space=sflag, size = 0x4, scoped, tag = 'scoped memory for tpu_custom_call.1']
    #allocation7 [shape = 'u8[4096]{0}', space=vmem, size = 0x1000, scoped, tag = 'output window, operand 0, single buffered']
    #allocation8 [shape = 'u8[4096]{0}', space=vmem, size = 0x1000, scoped, tag = 'output window, operand 1, single buffered']
    #allocation9 [shape = 's32[1]{0}', space=sflag, size = 0x4, scoped, tag = 'scoped memory for tpu_custom_call.1']
    %33 = vsyncpa [#allocation3], 0
    %34 = vsyncpa [#allocation6], 0
    %35 = vsyncpa [#allocation4], 0
    %36 = vsyncpa [#allocation9], 0
    // Predicated region
    $region2: #{tpu_custom_call.1} parent=1 // pred_check
      _
    $region3: #{tpu_custom_call.1} parent=1 // pred_check_branch
      %38 = sbr.rel (0) target = $region5
    $region4: #{tpu_custom_call.1} parent=1 // pred_region
      %s40 = ssub.s32 128, 128
      %41 = vsyncadd [#allocation3], %s40
      %s43 = sshll.u32 [#allocation2], 4
      %s44 = int_to_ptr.vmem [resolvable:$true] %s43
      %46 = dma.hbm_to_vmem [thread:$0]  %s0, 128, %s44, [#allocation3]
    $region5: #{tpu_custom_call.1} parent=1 // pred_fallthru
      _
    // Predicated region
    $region6: #{tpu_custom_call.1} parent=1 // pred_check
      _
    $region7: #{tpu_custom_call.1} parent=1 // pred_check_branch
      %48 = sbr.rel (0) target = $region9
    $region8: #{tpu_custom_call.1} parent=1 // pred_region
      %s50 = ssub.s32 128, 128
      %51 = vsyncadd [#allocation6], %s50
      %s53 = sshll.u32 [#allocation5], 4
      %s54 = int_to_ptr.vmem [resolvable:$true] %s53
      %56 = dma.hbm_to_vmem [thread:$0]  %s1, 128, %s54, [#allocation6]
    $region9: #{tpu_custom_call.1} parent=1 // pred_fallthru
      _
    // Predicated region
    $region10: #{tpu_custom_call.1} parent=1 // pred_check
      _
    $region11: #{tpu_custom_call.1} parent=1 // pred_check_branch
      %58 = sbr.rel (0) target = $region13
    $region12: #{tpu_custom_call.1} parent=1 // pred_region
      _
    $region13: #{tpu_custom_call.1} parent=1 // pred_fallthru
      _
    // Predicated region
    $region14: #{tpu_custom_call.1} parent=1 // pred_check
      _
    $region15: #{tpu_custom_call.1} parent=1 // pred_check_branch
      %60 = sbr.rel (0) target = $region17
    $region16: #{tpu_custom_call.1} parent=1 // pred_region
      _
    $region17: #{tpu_custom_call.1} parent=1 // pred_fallthru
      _
    // Predicated region
    $region18: #{tpu_custom_call.1} parent=1 // pred_check
      _
    $region19: #{tpu_custom_call.1} parent=1 // pred_check_branch
      %62 = sbr.rel (0) target = $region21
    $region20: #{tpu_custom_call.1} parent=1 // pred_region
      _
    $region21: #{tpu_custom_call.1} parent=1 // pred_fallthru
      _
    // Predicated region
    $region22: #{tpu_custom_call.1} parent=1 // pred_check
      _
    $region23: #{tpu_custom_call.1} parent=1 // pred_check_branch
      %64 = sbr.rel (0) target = $region25
    $region24: #{tpu_custom_call.1} parent=1 // pred_region
      _
    $region25: #{tpu_custom_call.1} parent=1 // pred_fallthru
      _
    // Predicated region
    $region26: #{tpu_custom_call.1} parent=1 // pred_check
      _
    $region27: #{tpu_custom_call.1} parent=1 // pred_check_branch
      %66 = sbr.rel (0) target = $region29
    $region28: #{tpu_custom_call.1} parent=1 // pred_region
      _
    $region29: #{tpu_custom_call.1} parent=1 // pred_fallthru
      _
    // Predicated region
    $region30: #{tpu_custom_call.1} parent=1 // pred_check
      _
    $region31: #{tpu_custom_call.1} parent=1 // pred_check_branch
      %68 = sbr.rel (0) target = $region33
    $region32: #{tpu_custom_call.1} parent=1 // pred_region
      _
    $region33: #{tpu_custom_call.1} parent=1 // pred_fallthru
      _
    // Predicated region
    $region34: #{tpu_custom_call.1} parent=1 // pred_check
      _
    $region35: #{tpu_custom_call.1} parent=1 // pred_check_branch
      %70 = sbr.rel (0) target = $region37
    $region36: #{tpu_custom_call.1} parent=1 // pred_region
      _
    $region37: #{tpu_custom_call.1} parent=1 // pred_fallthru
      _
    // Predicated region
    $region38: #{tpu_custom_call.1} parent=1 // pred_check
      _
    $region39: #{tpu_custom_call.1} parent=1 // pred_check_branch
      %72 = sbr.rel (0) target = $region41
    $region40: #{tpu_custom_call.1} parent=1 // pred_region
      _
    $region41: #{tpu_custom_call.1} parent=1 // pred_fallthru
      _
    // Predicated region
    $region42: #{tpu_custom_call.1} parent=1 // pred_check
      _
    $region43: #{tpu_custom_call.1} parent=1 // pred_check_branch
      %74 = sbr.rel (0) target = $region45
    $region44: #{tpu_custom_call.1} parent=1 // pred_region
      _
    $region45: #{tpu_custom_call.1} parent=1 // pred_fallthru
      _
    // Predicated region
    $region46: #{tpu_custom_call.1} parent=1 // pred_check
      _
    $region47: #{tpu_custom_call.1} parent=1 // pred_check_branch
      %76 = sbr.rel (0) target = $region49
    $region48: #{tpu_custom_call.1} parent=1 // pred_region
      _
    $region49: #{tpu_custom_call.1} parent=1 // pred_fallthru
      _
    // Predicated region
    $region50: #{tpu_custom_call.1} parent=1 // pred_check
      _
    $region51: #{tpu_custom_call.1} parent=1 // pred_check_branch
      %78 = sbr.rel (0) target = $region53
    $region52: #{tpu_custom_call.1} parent=1 // pred_region
      _
    $region53: #{tpu_custom_call.1} parent=1 // pred_fallthru
      _
    // Predicated region
    $region54: #{tpu_custom_call.1} parent=1 // pred_check
      _
    $region55: #{tpu_custom_call.1} parent=1 // pred_check_branch
      %80 = sbr.rel (0) target = $region57
    $region56: #{tpu_custom_call.1} parent=1 // pred_region
      _
    $region57: #{tpu_custom_call.1} parent=1 // pred_fallthru
      _
    // Predicated region
    $region58: #{tpu_custom_call.1} parent=1 // pred_check
      _
    $region59: #{tpu_custom_call.1} parent=1 // pred_check_branch
      %82 = sbr.rel (0) target = $region61
    $region60: #{tpu_custom_call.1} parent=1 // pred_region
      _
    $region61: #{tpu_custom_call.1} parent=1 // pred_fallthru
      _
    // Predicated region
    $region62: #{tpu_custom_call.1} parent=1 // pred_check
      _
    $region63: #{tpu_custom_call.1} parent=1 // pred_check_branch
      %84 = sbr.rel (0) target = $region65
    $region64: #{tpu_custom_call.1} parent=1 // pred_region
      _
    $region65: #{tpu_custom_call.1} parent=1 // pred_fallthru
      _
    // Predicated region
    $region66: #{tpu_custom_call.1} parent=1 // pred_check
      _
    $region67: #{tpu_custom_call.1} parent=1 // pred_check_branch
      %86 = sbr.rel (0) target = $region69
    $region68: #{tpu_custom_call.1} parent=1 // pred_region
      _
    $region69: #{tpu_custom_call.1} parent=1 // pred_fallthru
      _
    // Predicated region
    $region70: #{tpu_custom_call.1} parent=1 // pred_check
      _
    $region71: #{tpu_custom_call.1} parent=1 // pred_check_branch
      %88 = sbr.rel (0) target = $region73
    $region72: #{tpu_custom_call.1} parent=1 // pred_region
      _
    $region73: #{tpu_custom_call.1} parent=1 // pred_fallthru
      _
    // Predicated region
    $region74: #{tpu_custom_call.1} parent=1 // pred_check
      _
    $region75: #{tpu_custom_call.1} parent=1 // pred_check_branch
      %90 = sbr.rel (0) target = $region77
    $region76: #{tpu_custom_call.1} parent=1 // pred_region
      _
    $region77: #{tpu_custom_call.1} parent=1 // pred_fallthru
      _
    // Predicated region
    $region78: #{tpu_custom_call.1} parent=1 // pred_check
      _
    $region79: #{tpu_custom_call.1} parent=1 // pred_check_branch
      %92 = sbr.rel (0) target = $region81
    $region80: #{tpu_custom_call.1} parent=1 // pred_region
      _
    $region81: #{tpu_custom_call.1} parent=1 // pred_fallthru
      _
    // Predicated region
    $region82: #{tpu_custom_call.1} parent=1 // pred_check
      _
    $region83: #{tpu_custom_call.1} parent=1 // pred_check_branch
      %94 = sbr.rel (0) target = $region85
    $region84: #{tpu_custom_call.1} parent=1 // pred_region
      _
    $region85: #{tpu_custom_call.1} parent=1 // pred_fallthru
      _
    // Predicated region
    $region86: #{tpu_custom_call.1} parent=1 // pred_check
      _
    $region87: #{tpu_custom_call.1} parent=1 // pred_check_branch
      %96 = sbr.rel (0) target = $region89
    $region88: #{tpu_custom_call.1} parent=1 // pred_region
      _
    $region89: #{tpu_custom_call.1} parent=1 // pred_fallthru
      _
    // Predicated region
    $region90: #{tpu_custom_call.1} parent=1 // pred_check
      _
    $region91: #{tpu_custom_call.1} parent=1 // pred_check_branch
      %98 = sbr.rel (0) target = $region93
    $region92: #{tpu_custom_call.1} parent=1 // pred_region
      _
    $region93: #{tpu_custom_call.1} parent=1 // pred_fallthru
      _
    // Predicated region
    $region94: #{tpu_custom_call.1} parent=1 // pred_check
      _
    $region95: #{tpu_custom_call.1} parent=1 // pred_check_branch
      %100 = sbr.rel (0) target = $region97
    $region96: #{tpu_custom_call.1} parent=1 // pred_region
      _
    $region97: #{tpu_custom_call.1} parent=1 // pred_fallthru
      _
    // Predicated region
    $region98: #{tpu_custom_call.1} parent=1 // pred_check
      _
    $region99: #{tpu_custom_call.1} parent=1 // pred_check_branch
      %102 = sbr.rel (0) target = $region101
    $region100: #{tpu_custom_call.1} parent=1 // pred_region
      _
    $region101: #{tpu_custom_call.1} parent=1 // pred_fallthru
      _
    // Predicated region
    $region102: #{tpu_custom_call.1} parent=1 // pred_check
      _
    $region103: #{tpu_custom_call.1} parent=1 // pred_check_branch
      %104 = sbr.rel (0) target = $region105
    $region104: #{tpu_custom_call.1} parent=1 // pred_region
      _
    $region105: #{tpu_custom_call.1} parent=1 // pred_fallthru
      _
    // Predicated region
    $region106: #{tpu_custom_call.1} parent=1 // pred_check
      _
    $region107: #{tpu_custom_call.1} parent=1 // pred_check_branch
      %106 = sbr.rel (0) target = $region109
    $region108: #{tpu_custom_call.1} parent=1 // pred_region
      %107 = dma.done [#allocation3], 128
    $region109: #{tpu_custom_call.1} parent=1 // pred_fallthru
      _
    // Predicated region
    $region110: #{tpu_custom_call.1} parent=1 // pred_check
      _
    $region111: #{tpu_custom_call.1} parent=1 // pred_check_branch
      %109 = sbr.rel (0) target = $region113
    $region112: #{tpu_custom_call.1} parent=1 // pred_region
      %110 = dma.done [#allocation6], 128
    $region113: #{tpu_custom_call.1} parent=1 // pred_fallthru
      _
    %v112 = vld [vmem:[%s2] sm:$0xff]
    %v113 = vld [vmem:[%s3] sm:$0xff]
    %v114 = vld [vmem:[#allocation2] sm:$0xff]
    %v115 = vld [vmem:[#allocation5] sm:$0xff]
    %v116 = vld [vmem:[%s4] sm:$0xf]
    %v117 = vld [vmem:[%s4 + $0x4] sm:$0xf]
    %v118 = vld [vmem:[%s4 + $0x8] sm:$0xf]
    %v119 = vld [vmem:[%s4 + $0xc] sm:$0xf]
    %v120 = vld [vmem:[%s4 + $0x10] sm:$0xf]
    %v121 = vld [vmem:[%s4 + $0x14] sm:$0xf]
    %v122 = vld [vmem:[%s4 + $0x18] sm:$0xf]
    %v123 = vld [vmem:[%s4 + $0x1c] sm:$0xf]
    %v124 = vld [vmem:[%s4 + $0x20] sm:$0xf]
    %v125 = vld [vmem:[%s4 + $0x24] sm:$0xf]
    %v126 = vld [vmem:[%s4 + $0x28] sm:$0xf]
    %v127 = vld [vmem:[%s4 + $0x2c] sm:$0xf]
    %v128 = vld [vmem:[%s4 + $0x30] sm:$0xf]
    %v129 = vld [vmem:[%s4 + $0x34] sm:$0xf]
    %v130 = vld [vmem:[%s4 + $0x38] sm:$0xf]
    %v131 = vld [vmem:[%s4 + $0x3c] sm:$0xf]
    %v132 = vld [vmem:[%s5] sm:$0x1]
    %v133 = vpack.c.bf16 %v114, %v114
    %v135 = vlaneseq
    %v136 = vshrl.u32 %v135, 7
    %v137 = vsub.s32 0, %v136
    %v138 = vrot.slane %v132, %v137
    %v156 = vunpack.c.l.b16 %v116
    %v157 = vunpack.c.l.b16 %v117
    %v158 = vunpack.c.l.b16 %v118
    %v159 = vunpack.c.l.b16 %v119
    %v160 = vunpack.c.l.b16 %v120
    %v161 = vunpack.c.l.b16 %v121
    %v162 = vunpack.c.l.b16 %v122
    %v163 = vunpack.c.l.b16 %v123
    %v164 = vunpack.c.l.b16 %v124
    %v165 = vunpack.c.l.b16 %v125
    %v166 = vunpack.c.l.b16 %v126
    %v167 = vunpack.c.l.b16 %v127
    %v168 = vunpack.c.l.b16 %v128
    %v169 = vunpack.c.l.b16 %v129
    %v170 = vunpack.c.l.b16 %v130
    %v171 = vunpack.c.l.b16 %v131
    %v172 = vpack.c.b16 %v157, %v156
    %v173 = vpack.c.b16 %v159, %v158
    %v174 = vpack.c.b16 %v161, %v160
    %v175 = vpack.c.b16 %v163, %v162
    %v176 = vpack.c.b16 %v165, %v164
    %v177 = vpack.c.b16 %v167, %v166
    %v178 = vpack.c.b16 %v169, %v168
    %v179 = vpack.c.b16 %v171, %v170
    %188 = vmatprep.subr.bf16.mxu0 0
    %189 = vmatpush1.bf16.msra.mxu0 %v179
    %190 = vmatprep.subr.bf16.mxu0 0
    %191 = vmatpush1.bf16.msra.mxu0 %v178
    %192 = vmatprep.subr.bf16.mxu0 0
    %193 = vmatpush1.bf16.msra.mxu0 %v177
    %194 = vmatprep.subr.bf16.mxu0 0
    %195 = vmatpush1.bf16.msra.mxu0 %v176
    %196 = vmatprep.subr.bf16.mxu0 0
    %197 = vmatpush1.bf16.msra.mxu0 %v175
    %198 = vmatprep.subr.bf16.mxu0 0
    %199 = vmatpush1.bf16.msra.mxu0 %v174
    %200 = vmatprep.subr.bf16.mxu0 0
    %201 = vmatpush1.bf16.msra.mxu0 %v173
    %202 = vmatprep.subr.bf16.mxu0 0
    %203 = vmatpush1.bf16.msra.mxu0 %v172
    %204 = vmatprep.subr.bf16.mxu0 0
    %205 = vmatpush2.bf16.msra.mxu0 0
    %206 = vmatprep.subr.bf16.mxu0 0
    %207 = vmatpush2.bf16.msra.mxu0 0
    %208 = vmatprep.subr.bf16.mxu0 0
    %209 = vmatpush2.bf16.msra.mxu0 0
    %210 = vmatprep.subr.bf16.mxu0 0
    %211 = vmatpush2.bf16.msra.mxu0 0
    %212 = vmatprep.subr.bf16.mxu0 0
    %213 = vmatpush2.bf16.msra.mxu0 0
    %214 = vmatprep.subr.bf16.mxu0 0
    %215 = vmatpush2.bf16.msra.mxu0 0
    %216 = vmatprep.subr.bf16.mxu0 0
    %217 = vmatpush2.bf16.msra.mxu0 0
    %218 = vmatprep.subr.bf16.mxu0 0
    %219 = vmatpush2.bf16.msra.mxu0 0
    %220 = vmatprep.mubr.bf16.mxu0 0
    %221 = vmatmul.mubr.bf16.gmra.mxu0 %v133
    %v222 = vpop.f32.mrf.mxu0
    %v223 = vadd.f32 %v138, %v222
    %v224 = vpop.f32.mrf.mxu0
    %v225 = vpop.f32.mrf.mxu0
    %v226 = vpop.f32.mrf.mxu0
    %227 = vdwg.mxu0
    %v228 = vmax.f32 %v223, 0.0
    %v229 = vld [vmem:[%s6] sm:$0xf]
    %v230 = vld [vmem:[%s6 + $0x4] sm:$0xf]
    %v231 = vld [vmem:[%s6 + $0x8] sm:$0xf]
    %v232 = vld [vmem:[%s6 + $0xc] sm:$0xf]
    %v233 = vld [vmem:[%s7] sm:$0x1]
    %v234 = vpack.c.bf16 %v228, %v228
    %v236 = vlaneseq
    %v237 = vshrl.u32 %v236, 7
    %v238 = vsub.s32 0, %v237
    %v239 = vrot.slane %v233, %v238
    %v245 = vunpack.c.l.b16 %v229
    %v246 = vunpack.c.l.b16 %v230
    %v247 = vunpack.c.l.b16 %v231
    %v248 = vunpack.c.l.b16 %v232
    %v249 = vpack.c.b16 %v246, %v245
    %v250 = vpack.c.b16 %v248, %v247
    %vm253 = vcmask 261120
    %v255 = vsel %vm253, %v234, 0
    %257 = vmatprep.subr.bf16.mxu0 0
    %258 = vmatpush1.bf16.msra.mxu0 0
    %259 = vmatprep.subr.bf16.mxu0 0
    %260 = vmatpush1.bf16.msra.mxu0 0
    %261 = vmatprep.subr.bf16.mxu0 0
    %262 = vmatpush1.bf16.msra.mxu0 0
    %263 = vmatprep.subr.bf16.mxu0 0
    %264 = vmatpush1.bf16.msra.mxu0 0
    %265 = vmatprep.subr.bf16.mxu0 0
    %266 = vmatpush1.bf16.msra.mxu0 0
    %267 = vmatprep.subr.bf16.mxu0 0
    %268 = vmatpush1.bf16.msra.mxu0 0
    %269 = vmatprep.subr.bf16.mxu0 0
    %270 = vmatpush1.bf16.msra.mxu0 %v250
    %271 = vmatprep.subr.bf16.mxu0 0
    %272 = vmatpush1.bf16.msra.mxu0 %v249
    %273 = vmatprep.subr.bf16.mxu0 0
    %274 = vmatpush2.bf16.msra.mxu0 0
    %275 = vmatprep.subr.bf16.mxu0 0
    %276 = vmatpush2.bf16.msra.mxu0 0
    %277 = vmatprep.subr.bf16.mxu0 0
    %278 = vmatpush2.bf16.msra.mxu0 0
    %279 = vmatprep.subr.bf16.mxu0 0
    %280 = vmatpush2.bf16.msra.mxu0 0
    %281 = vmatprep.subr.bf16.mxu0 0
    %282 = vmatpush2.bf16.msra.mxu0 0
    %283 = vmatprep.subr.bf16.mxu0 0
    %284 = vmatpush2.bf16.msra.mxu0 0
    %285 = vmatprep.subr.bf16.mxu0 0
    %286 = vmatpush2.bf16.msra.mxu0 0
    %287 = vmatprep.subr.bf16.mxu0 0
    %288 = vmatpush2.bf16.msra.mxu0 0
    %289 = vmatprep.mubr.bf16.mxu0 0
    %290 = vmatmul.mubr.bf16.gmra.mxu0 %v255
    %v291 = vpop.f32.mrf.mxu0
    %v292 = vadd.f32 %v239, %v291
    %v293 = vpop.f32.mrf.mxu0
    %v294 = vpop.f32.mrf.mxu0
    %v295 = vpop.f32.mrf.mxu0
    %296 = vdwg.mxu0
    %v297 = vmax.f32 %v292, 0.0
    %v298 = vld [vmem:[%s8] sm:$0xf]
    %v299 = vld [vmem:[%s8 + $0x4] sm:$0xf]
    %v300 = vld [vmem:[%s8 + $0x8] sm:$0xf]
    %v301 = vld [vmem:[%s8 + $0xc] sm:$0xf]
    %v302 = vld [vmem:[%s8 + $0x10] sm:$0xf]
    %v303 = vld [vmem:[%s8 + $0x14] sm:$0xf]
    %v304 = vld [vmem:[%s8 + $0x18] sm:$0xf]
    %v305 = vld [vmem:[%s8 + $0x1c] sm:$0xf]
    %v306 = vld [vmem:[%s9] sm:$0x1]
    %v307 = vld [vmem:[%s10] sm:$0xff]
    %v308 = vld [vmem:[%s10 + $0x8] sm:$0xff]
    %v309 = vld [vmem:[%s10 + $0x10] sm:$0xff]
    %v310 = vld [vmem:[%s11] sm:$0x3]
    %v311 = vpack.c.bf16 %v297, %v297
    %v313 = vlaneseq
    %v314 = vshrl.u32 %v313, 7
    %v315 = vsub.s32 0, %v314
    %v316 = vrot.slane %v306, %v315
    %v326 = vunpack.c.l.b16 %v298
    %v327 = vunpack.c.l.b16 %v299
    %v328 = vunpack.c.l.b16 %v300
    %v329 = vunpack.c.l.b16 %v301
    %v330 = vunpack.c.l.b16 %v302
    %v331 = vunpack.c.l.b16 %v303
    %v332 = vunpack.c.l.b16 %v304
    %v333 = vunpack.c.l.b16 %v305
    %v334 = vpack.c.b16 %v327, %v326
    %v335 = vpack.c.b16 %v329, %v328
    %v336 = vpack.c.b16 %v331, %v330
    %v337 = vpack.c.b16 %v333, %v332
    %vm342 = vcmask 523264
    %v344 = vsel %vm342, %v311, 0
    %346 = vmatprep.subr.bf16.mxu0 0
    %347 = vmatpush1.bf16.msra.mxu0 0
    %348 = vmatprep.subr.bf16.mxu0 0
    %349 = vmatpush1.bf16.msra.mxu0 0
    %350 = vmatprep.subr.bf16.mxu0 0
    %351 = vmatpush1.bf16.msra.mxu0 0
    %352 = vmatprep.subr.bf16.mxu0 0
    %353 = vmatpush1.bf16.msra.mxu0 0
    %354 = vmatprep.subr.bf16.mxu0 0
    %355 = vmatpush1.bf16.msra.mxu0 %v337
    %356 = vmatprep.subr.bf16.mxu0 0
    %357 = vmatpush1.bf16.msra.mxu0 %v336
    %358 = vmatprep.subr.bf16.mxu0 0
    %359 = vmatpush1.bf16.msra.mxu0 %v335
    %360 = vmatprep.subr.bf16.mxu0 0
    %361 = vmatpush1.bf16.msra.mxu0 %v334
    %362 = vmatprep.subr.bf16.mxu0 0
    %363 = vmatpush2.bf16.msra.mxu0 0
    %364 = vmatprep.subr.bf16.mxu0 0
    %365 = vmatpush2.bf16.msra.mxu0 0
    %366 = vmatprep.subr.bf16.mxu0 0
    %367 = vmatpush2.bf16.msra.mxu0 0
    %368 = vmatprep.subr.bf16.mxu0 0
    %369 = vmatpush2.bf16.msra.mxu0 0
    %370 = vmatprep.subr.bf16.mxu0 0
    %371 = vmatpush2.bf16.msra.mxu0 0
    %372 = vmatprep.subr.bf16.mxu0 0
    %373 = vmatpush2.bf16.msra.mxu0 0
    %374 = vmatprep.subr.bf16.mxu0 0
    %375 = vmatpush2.bf16.msra.mxu0 0
    %376 = vmatprep.subr.bf16.mxu0 0
    %377 = vmatpush2.bf16.msra.mxu0 0
    %378 = vmatprep.mubr.bf16.mxu0 0
    %379 = vmatmul.mubr.bf16.gmra.mxu0 %v344
    %v380 = vpop.f32.mrf.mxu0
    %v381 = vadd.f32 %v316, %v380
    %v382 = vpop.f32.mrf.mxu0
    %v383 = vpop.f32.mrf.mxu0
    %v384 = vpop.f32.mrf.mxu0
    %385 = vdwg.mxu0
    %v386 = vpack.c.bf16 %v381, %v381
    %v388 = vlaneseq
    %v389 = vshrl.u32 %v388, 7
    %v390 = vsub.s32 0, %v389
    %v391 = vrot.slane %v310, %v390
    %v392 = vlaneseq
    %v393 = vshrl.u32 %v392, 7
    %v394 = vsub.s32 1, %v393
    %v395 = vrot.slane %v310, %v394
    %v401 = vunpack.c.l.b16 %v307
    %v402 = vunpack.c.h.b16 %v307
    %v403 = vunpack.c.l.b16 %v308
    %v404 = vunpack.c.h.b16 %v308
    %v405 = vunpack.c.l.b16 %v309
    %v406 = vunpack.c.h.b16 %v309
    %v407 = vpack.c.b16 %v403, %v401
    %v408 = vpack.c.b16 %v404, %v402
    %v409 = vpack.c.b16 %v405, %v405
    %v410 = vpack.c.b16 %v406, %v406
    %vm413 = vcmask 195584
    %v415 = vsel %vm413, %v386, 0
    %vm417 = vcmask 1043456
    %v419 = vsel %vm417, %v409, 0
    %v422 = vsel %vm417, %v410, 0
    %424 = vmatprep.subr.bf16.mxu0 0
    %425 = vmatpush1.bf16.msra.mxu0 0
    %426 = vmatprep.subr.bf16.mxu0 0
    %427 = vmatpush1.bf16.msra.mxu0 0
    %428 = vmatprep.subr.bf16.mxu0 0
    %429 = vmatpush1.bf16.msra.mxu0 0
    %430 = vmatprep.subr.bf16.mxu0 0
    %431 = vmatpush1.bf16.msra.mxu0 0
    %432 = vmatprep.subr.bf16.mxu0 0
    %433 = vmatpush1.bf16.msra.mxu0 0
    %434 = vmatprep.subr.bf16.mxu0 0
    %435 = vmatpush1.bf16.msra.mxu0 0
    %436 = vmatprep.subr.bf16.mxu0 %v422
    %437 = vmatpush1.bf16.msra.mxu0 %v419
    %438 = vmatprep.subr.bf16.mxu0 %v408
    %439 = vmatpush1.bf16.msra.mxu0 %v407
    %440 = vmatprep.subr.bf16.mxu0 0
    %441 = vmatpush2.bf16.msra.mxu0 0
    %442 = vmatprep.subr.bf16.mxu0 0
    %443 = vmatpush2.bf16.msra.mxu0 0
    %444 = vmatprep.subr.bf16.mxu0 0
    %445 = vmatpush2.bf16.msra.mxu0 0
    %446 = vmatprep.subr.bf16.mxu0 0
    %447 = vmatpush2.bf16.msra.mxu0 0
    %448 = vmatprep.subr.bf16.mxu0 0
    %449 = vmatpush2.bf16.msra.mxu0 0
    %450 = vmatprep.subr.bf16.mxu0 0
    %451 = vmatpush2.bf16.msra.mxu0 0
    %452 = vmatprep.subr.bf16.mxu0 0
    %453 = vmatpush2.bf16.msra.mxu0 0
    %454 = vmatprep.subr.bf16.mxu0 0
    %455 = vmatpush2.bf16.msra.mxu0 0
    %456 = vmatprep.mubr.bf16.mxu0 0
    %457 = vmatmul.mubr.bf16.gmra.mxu0 %v415
    %v458 = vpop.f32.mrf.mxu0
    %v459 = vadd.f32 %v391, %v458
    %v460 = vpop.f32.mrf.mxu0
    %v461 = vadd.f32 %v395, %v460
    %v462 = vpop.f32.mrf.mxu0
    %v463 = vpop.f32.mrf.mxu0
    %464 = vdwg.mxu0
    %v465 = vmul.f32 %v459, %v113
    %v466 = vadd.f32 %v115, %v465
    %v467 = vmul.f32 %v461, %v112
    %v468 = vsub.f32 %v114, %v467
    %v469 = vld [vmem:[%s12] sm:$0xf]
    %v470 = vld [vmem:[%s12 + $0x4] sm:$0xf]
    %v471 = vld [vmem:[%s12 + $0x8] sm:$0xf]
    %v472 = vld [vmem:[%s12 + $0xc] sm:$0xf]
    %v473 = vld [vmem:[%s12 + $0x10] sm:$0xf]
    %v474 = vld [vmem:[%s12 + $0x14] sm:$0xf]
    %v475 = vld [vmem:[%s12 + $0x18] sm:$0xf]
    %v476 = vld [vmem:[%s12 + $0x1c] sm:$0xf]
    %v477 = vld [vmem:[%s12 + $0x20] sm:$0xf]
    %v478 = vld [vmem:[%s12 + $0x24] sm:$0xf]
    %v479 = vld [vmem:[%s12 + $0x28] sm:$0xf]
    %v480 = vld [vmem:[%s12 + $0x2c] sm:$0xf]
    %v481 = vld [vmem:[%s12 + $0x30] sm:$0xf]
    %v482 = vld [vmem:[%s12 + $0x34] sm:$0xf]
    %v483 = vld [vmem:[%s12 + $0x38] sm:$0xf]
    %v484 = vld [vmem:[%s12 + $0x3c] sm:$0xf]
    %v485 = vld [vmem:[%s13] sm:$0x1]
    %v486 = vpack.c.bf16 %v468, %v468
    %v488 = vlaneseq
    %v489 = vshrl.u32 %v488, 7
    %v490 = vsub.s32 0, %v489
    %v491 = vrot.slane %v485, %v490
    %v509 = vunpack.c.l.b16 %v469
    %v510 = vunpack.c.l.b16 %v470
    %v511 = vunpack.c.l.b16 %v471
    %v512 = vunpack.c.l.b16 %v472
    %v513 = vunpack.c.l.b16 %v473
    %v514 = vunpack.c.l.b16 %v474
    %v515 = vunpack.c.l.b16 %v475
    %v516 = vunpack.c.l.b16 %v476
    %v517 = vunpack.c.l.b16 %v477
    %v518 = vunpack.c.l.b16 %v478
    %v519 = vunpack.c.l.b16 %v479
    %v520 = vunpack.c.l.b16 %v480
    %v521 = vunpack.c.l.b16 %v481
    %v522 = vunpack.c.l.b16 %v482
    %v523 = vunpack.c.l.b16 %v483
    %v524 = vunpack.c.l.b16 %v484
    %v525 = vpack.c.b16 %v510, %v509
    %v526 = vpack.c.b16 %v512, %v511
    %v527 = vpack.c.b16 %v514, %v513
    %v528 = vpack.c.b16 %v516, %v515
    %v529 = vpack.c.b16 %v518, %v517
    %v530 = vpack.c.b16 %v520, %v519
    %v531 = vpack.c.b16 %v522, %v521
    %v532 = vpack.c.b16 %v524, %v523
    %541 = vmatprep.subr.bf16.mxu0 0
    %542 = vmatpush1.bf16.msra.mxu0 %v532
    %543 = vmatprep.subr.bf16.mxu0 0
    %544 = vmatpush1.bf16.msra.mxu0 %v531
    %545 = vmatprep.subr.bf16.mxu0 0
    %546 = vmatpush1.bf16.msra.mxu0 %v530
    %547 = vmatprep.subr.bf16.mxu0 0
    %548 = vmatpush1.bf16.msra.mxu0 %v529
    %549 = vmatprep.subr.bf16.mxu0 0
    %550 = vmatpush1.bf16.msra.mxu0 %v528
    %551 = vmatprep.subr.bf16.mxu0 0
    %552 = vmatpush1.bf16.msra.mxu0 %v527
    %553 = vmatprep.subr.bf16.mxu0 0
    %554 = vmatpush1.bf16.msra.mxu0 %v526
    %555 = vmatprep.subr.bf16.mxu0 0
    %556 = vmatpush1.bf16.msra.mxu0 %v525
    %557 = vmatprep.subr.bf16.mxu0 0
    %558 = vmatpush2.bf16.msra.mxu0 0
    %559 = vmatprep.subr.bf16.mxu0 0
    %560 = vmatpush2.bf16.msra.mxu0 0
    %561 = vmatprep.subr.bf16.mxu0 0
    %562 = vmatpush2.bf16.msra.mxu0 0
    %563 = vmatprep.subr.bf16.mxu0 0
    %564 = vmatpush2.bf16.msra.mxu0 0
    %565 = vmatprep.subr.bf16.mxu0 0
    %566 = vmatpush2.bf16.msra.mxu0 0
    %567 = vmatprep.subr.bf16.mxu0 0
    %568 = vmatpush2.bf16.msra.mxu0 0
    %569 = vmatprep.subr.bf16.mxu0 0
    %570 = vmatpush2.bf16.msra.mxu0 0
    %571 = vmatprep.subr.bf16.mxu0 0
    %572 = vmatpush2.bf16.msra.mxu0 0
    %573 = vmatprep.mubr.bf16.mxu0 0
    %574 = vmatmul.mubr.bf16.gmra.mxu0 %v486
    %v575 = vpop.f32.mrf.mxu0
    %v576 = vadd.f32 %v491, %v575
    %v577 = vpop.f32.mrf.mxu0
    %v578 = vpop.f32.mrf.mxu0
    %v579 = vpop.f32.mrf.mxu0
    %580 = vdwg.mxu0
    %v581 = vmax.f32 %v576, 0.0
    %v582 = vld [vmem:[%s14] sm:$0xf]
    %v583 = vld [vmem:[%s14 + $0x4] sm:$0xf]
    %v584 = vld [vmem:[%s14 + $0x8] sm:$0xf]
    %v585 = vld [vmem:[%s14 + $0xc] sm:$0xf]
    %v586 = vld [vmem:[%s15] sm:$0x1]
    %v587 = vpack.c.bf16 %v581, %v581
    %v589 = vlaneseq
    %v590 = vshrl.u32 %v589, 7
    %v591 = vsub.s32 0, %v590
    %v592 = vrot.slane %v586, %v591
    %v598 = vunpack.c.l.b16 %v582
    %v599 = vunpack.c.l.b16 %v583
    %v600 = vunpack.c.l.b16 %v584
    %v601 = vunpack.c.l.b16 %v585
    %v602 = vpack.c.b16 %v599, %v598
    %v603 = vpack.c.b16 %v601, %v600
    %v607 = vsel %vm253, %v587, 0
    %609 = vmatprep.subr.bf16.mxu0 0
    %610 = vmatpush1.bf16.msra.mxu0 0
    %611 = vmatprep.subr.bf16.mxu0 0
    %612 = vmatpush1.bf16.msra.mxu0 0
    %613 = vmatprep.subr.bf16.mxu0 0
    %614 = vmatpush1.bf16.msra.mxu0 0
    %615 = vmatprep.subr.bf16.mxu0 0
    %616 = vmatpush1.bf16.msra.mxu0 0
    %617 = vmatprep.subr.bf16.mxu0 0
    %618 = vmatpush1.bf16.msra.mxu0 0
    %619 = vmatprep.subr.bf16.mxu0 0
    %620 = vmatpush1.bf16.msra.mxu0 0
    %621 = vmatprep.subr.bf16.mxu0 0
    %622 = vmatpush1.bf16.msra.mxu0 %v603
    %623 = vmatprep.subr.bf16.mxu0 0
    %624 = vmatpush1.bf16.msra.mxu0 %v602
    %625 = vmatprep.subr.bf16.mxu0 0
    %626 = vmatpush2.bf16.msra.mxu0 0
    %627 = vmatprep.subr.bf16.mxu0 0
    %628 = vmatpush2.bf16.msra.mxu0 0
    %629 = vmatprep.subr.bf16.mxu0 0
    %630 = vmatpush2.bf16.msra.mxu0 0
    %631 = vmatprep.subr.bf16.mxu0 0
    %632 = vmatpush2.bf16.msra.mxu0 0
    %633 = vmatprep.subr.bf16.mxu0 0
    %634 = vmatpush2.bf16.msra.mxu0 0
    %635 = vmatprep.subr.bf16.mxu0 0
    %636 = vmatpush2.bf16.msra.mxu0 0
    %637 = vmatprep.subr.bf16.mxu0 0
    %638 = vmatpush2.bf16.msra.mxu0 0
    %639 = vmatprep.subr.bf16.mxu0 0
    %640 = vmatpush2.bf16.msra.mxu0 0
    %641 = vmatprep.mubr.bf16.mxu0 0
    %642 = vmatmul.mubr.bf16.gmra.mxu0 %v607
    %v643 = vpop.f32.mrf.mxu0
    %v644 = vadd.f32 %v592, %v643
    %v645 = vpop.f32.mrf.mxu0
    %v646 = vpop.f32.mrf.mxu0
    %v647 = vpop.f32.mrf.mxu0
    %648 = vdwg.mxu0
    %v649 = vmax.f32 %v644, 0.0
    %v650 = vld [vmem:[%s16] sm:$0xf]
    %v651 = vld [vmem:[%s16 + $0x4] sm:$0xf]
    %v652 = vld [vmem:[%s16 + $0x8] sm:$0xf]
    %v653 = vld [vmem:[%s16 + $0xc] sm:$0xf]
    %v654 = vld [vmem:[%s16 + $0x10] sm:$0xf]
    %v655 = vld [vmem:[%s16 + $0x14] sm:$0xf]
    %v656 = vld [vmem:[%s16 + $0x18] sm:$0xf]
    %v657 = vld [vmem:[%s16 + $0x1c] sm:$0xf]
    %v658 = vld [vmem:[%s17] sm:$0x1]
    %v659 = vld [vmem:[%s18] sm:$0xff]
    %v660 = vld [vmem:[%s18 + $0x8] sm:$0xff]
    %v661 = vld [vmem:[%s18 + $0x10] sm:$0xff]
    %v662 = vld [vmem:[%s19] sm:$0x3]
    %v663 = vpack.c.bf16 %v649, %v649
    %v665 = vlaneseq
    %v666 = vshrl.u32 %v665, 7
    %v667 = vsub.s32 0, %v666
    %v668 = vrot.slane %v658, %v667
    %v678 = vunpack.c.l.b16 %v650
    %v679 = vunpack.c.l.b16 %v651
    %v680 = vunpack.c.l.b16 %v652
    %v681 = vunpack.c.l.b16 %v653
    %v682 = vunpack.c.l.b16 %v654
    %v683 = vunpack.c.l.b16 %v655
    %v684 = vunpack.c.l.b16 %v656
    %v685 = vunpack.c.l.b16 %v657
    %v686 = vpack.c.b16 %v679, %v678
    %v687 = vpack.c.b16 %v681, %v680
    %v688 = vpack.c.b16 %v683, %v682
    %v689 = vpack.c.b16 %v685, %v684
    %v695 = vsel %vm342, %v663, 0
    %697 = vmatprep.subr.bf16.mxu0 0
    %698 = vmatpush1.bf16.msra.mxu0 0
    %699 = vmatprep.subr.bf16.mxu0 0
    %700 = vmatpush1.bf16.msra.mxu0 0
    %701 = vmatprep.subr.bf16.mxu0 0
    %702 = vmatpush1.bf16.msra.mxu0 0
    %703 = vmatprep.subr.bf16.mxu0 0
    %704 = vmatpush1.bf16.msra.mxu0 0
    %705 = vmatprep.subr.bf16.mxu0 0
    %706 = vmatpush1.bf16.msra.mxu0 %v689
    %707 = vmatprep.subr.bf16.mxu0 0
    %708 = vmatpush1.bf16.msra.mxu0 %v688
    %709 = vmatprep.subr.bf16.mxu0 0
    %710 = vmatpush1.bf16.msra.mxu0 %v687
    %711 = vmatprep.subr.bf16.mxu0 0
    %712 = vmatpush1.bf16.msra.mxu0 %v686
    %713 = vmatprep.subr.bf16.mxu0 0
    %714 = vmatpush2.bf16.msra.mxu0 0
    %715 = vmatprep.subr.bf16.mxu0 0
    %716 = vmatpush2.bf16.msra.mxu0 0
    %717 = vmatprep.subr.bf16.mxu0 0
    %718 = vmatpush2.bf16.msra.mxu0 0
    %719 = vmatprep.subr.bf16.mxu0 0
    %720 = vmatpush2.bf16.msra.mxu0 0
    %721 = vmatprep.subr.bf16.mxu0 0
    %722 = vmatpush2.bf16.msra.mxu0 0
    %723 = vmatprep.subr.bf16.mxu0 0
    %724 = vmatpush2.bf16.msra.mxu0 0
    %725 = vmatprep.subr.bf16.mxu0 0
    %726 = vmatpush2.bf16.msra.mxu0 0
    %727 = vmatprep.subr.bf16.mxu0 0
    %728 = vmatpush2.bf16.msra.mxu0 0
    %729 = vmatprep.mubr.bf16.mxu0 0
    %730 = vmatmul.mubr.bf16.gmra.mxu0 %v695
    %v731 = vpop.f32.mrf.mxu0
    %v732 = vadd.f32 %v668, %v731
    %v733 = vpop.f32.mrf.mxu0
    %v734 = vpop.f32.mrf.mxu0
    %v735 = vpop.f32.mrf.mxu0
    %736 = vdwg.mxu0
    %v737 = vpack.c.bf16 %v732, %v732
    %v739 = vlaneseq
    %v740 = vshrl.u32 %v739, 7
    %v741 = vsub.s32 0, %v740
    %v742 = vrot.slane %v662, %v741
    %v743 = vlaneseq
    %v744 = vshrl.u32 %v743, 7
    %v745 = vsub.s32 1, %v744
    %v746 = vrot.slane %v662, %v745
    %v752 = vunpack.c.l.b16 %v659
    %v753 = vunpack.c.h.b16 %v659
    %v754 = vunpack.c.l.b16 %v660
    %v755 = vunpack.c.h.b16 %v660
    %v756 = vunpack.c.l.b16 %v661
    %v757 = vunpack.c.h.b16 %v661
    %v758 = vpack.c.b16 %v754, %v752
    %v759 = vpack.c.b16 %v755, %v753
    %v760 = vpack.c.b16 %v756, %v756
    %v761 = vpack.c.b16 %v757, %v757
    %v765 = vsel %vm413, %v737, 0
    %v768 = vsel %vm417, %v760, 0
    %v771 = vsel %vm417, %v761, 0
    %773 = vmatprep.subr.bf16.mxu0 0
    %774 = vmatpush1.bf16.msra.mxu0 0
    %775 = vmatprep.subr.bf16.mxu0 0
    %776 = vmatpush1.bf16.msra.mxu0 0
    %777 = vmatprep.subr.bf16.mxu0 0
    %778 = vmatpush1.bf16.msra.mxu0 0
    %779 = vmatprep.subr.bf16.mxu0 0
    %780 = vmatpush1.bf16.msra.mxu0 0
    %781 = vmatprep.subr.bf16.mxu0 0
    %782 = vmatpush1.bf16.msra.mxu0 0
    %783 = vmatprep.subr.bf16.mxu0 0
    %784 = vmatpush1.bf16.msra.mxu0 0
    %785 = vmatprep.subr.bf16.mxu0 %v771
    %786 = vmatpush1.bf16.msra.mxu0 %v768
    %787 = vmatprep.subr.bf16.mxu0 %v759
    %788 = vmatpush1.bf16.msra.mxu0 %v758
    %789 = vmatprep.subr.bf16.mxu0 0
    %790 = vmatpush2.bf16.msra.mxu0 0
    %791 = vmatprep.subr.bf16.mxu0 0
    %792 = vmatpush2.bf16.msra.mxu0 0
    %793 = vmatprep.subr.bf16.mxu0 0
    %794 = vmatpush2.bf16.msra.mxu0 0
    %795 = vmatprep.subr.bf16.mxu0 0
    %796 = vmatpush2.bf16.msra.mxu0 0
    %797 = vmatprep.subr.bf16.mxu0 0
    %798 = vmatpush2.bf16.msra.mxu0 0
    %799 = vmatprep.subr.bf16.mxu0 0
    %800 = vmatpush2.bf16.msra.mxu0 0
    %801 = vmatprep.subr.bf16.mxu0 0
    %802 = vmatpush2.bf16.msra.mxu0 0
    %803 = vmatprep.subr.bf16.mxu0 0
    %804 = vmatpush2.bf16.msra.mxu0 0
    %805 = vmatprep.mubr.bf16.mxu0 0
    %806 = vmatmul.mubr.bf16.gmra.mxu0 %v765
    %v807 = vpop.f32.mrf.mxu0
    %v808 = vadd.f32 %v742, %v807
    %v809 = vpop.f32.mrf.mxu0
    %v810 = vadd.f32 %v746, %v809
    %v811 = vpop.f32.mrf.mxu0
    %v812 = vpop.f32.mrf.mxu0
    %813 = vdwg.mxu0
    %v814 = vmul.f32 %v808, %v113
    %v815 = vadd.f32 %v466, %v814
    %v816 = vmul.f32 %v810, %v112
    %v817 = vsub.f32 %v468, %v816
    %v818 = vld [vmem:[%s20] sm:$0xf]
    %v819 = vld [vmem:[%s20 + $0x4] sm:$0xf]
    %v820 = vld [vmem:[%s20 + $0x8] sm:$0xf]
    %v821 = vld [vmem:[%s20 + $0xc] sm:$0xf]
    %v822 = vld [vmem:[%s20 + $0x10] sm:$0xf]
    %v823 = vld [vmem:[%s20 + $0x14] sm:$0xf]
    %v824 = vld [vmem:[%s20 + $0x18] sm:$0xf]
    %v825 = vld [vmem:[%s20 + $0x1c] sm:$0xf]
    %v826 = vld [vmem:[%s20 + $0x20] sm:$0xf]
    %v827 = vld [vmem:[%s20 + $0x24] sm:$0xf]
    %v828 = vld [vmem:[%s20 + $0x28] sm:$0xf]
    %v829 = vld [vmem:[%s20 + $0x2c] sm:$0xf]
    %v830 = vld [vmem:[%s20 + $0x30] sm:$0xf]
    %v831 = vld [vmem:[%s20 + $0x34] sm:$0xf]
    %v832 = vld [vmem:[%s20 + $0x38] sm:$0xf]
    %v833 = vld [vmem:[%s20 + $0x3c] sm:$0xf]
    %v834 = vld [vmem:[%s21] sm:$0x1]
    %v835 = vpack.c.bf16 %v817, %v817
    %v837 = vlaneseq
    %v838 = vshrl.u32 %v837, 7
    %v839 = vsub.s32 0, %v838
    %v840 = vrot.slane %v834, %v839
    %v858 = vunpack.c.l.b16 %v818
    %v859 = vunpack.c.l.b16 %v819
    %v860 = vunpack.c.l.b16 %v820
    %v861 = vunpack.c.l.b16 %v821
    %v862 = vunpack.c.l.b16 %v822
    %v863 = vunpack.c.l.b16 %v823
    %v864 = vunpack.c.l.b16 %v824
    %v865 = vunpack.c.l.b16 %v825
    %v866 = vunpack.c.l.b16 %v826
    %v867 = vunpack.c.l.b16 %v827
    %v868 = vunpack.c.l.b16 %v828
    %v869 = vunpack.c.l.b16 %v829
    %v870 = vunpack.c.l.b16 %v830
    %v871 = vunpack.c.l.b16 %v831
    %v872 = vunpack.c.l.b16 %v832
    %v873 = vunpack.c.l.b16 %v833
    %v874 = vpack.c.b16 %v859, %v858
    %v875 = vpack.c.b16 %v861, %v860
    %v876 = vpack.c.b16 %v863, %v862
    %v877 = vpack.c.b16 %v865, %v864
    %v878 = vpack.c.b16 %v867, %v866
    %v879 = vpack.c.b16 %v869, %v868
    %v880 = vpack.c.b16 %v871, %v870
    %v881 = vpack.c.b16 %v873, %v872
    %890 = vmatprep.subr.bf16.mxu0 0
    %891 = vmatpush1.bf16.msra.mxu0 %v881
    %892 = vmatprep.subr.bf16.mxu0 0
    %893 = vmatpush1.bf16.msra.mxu0 %v880
    %894 = vmatprep.subr.bf16.mxu0 0
    %895 = vmatpush1.bf16.msra.mxu0 %v879
    %896 = vmatprep.subr.bf16.mxu0 0
    %897 = vmatpush1.bf16.msra.mxu0 %v878
    %898 = vmatprep.subr.bf16.mxu0 0
    %899 = vmatpush1.bf16.msra.mxu0 %v877
    %900 = vmatprep.subr.bf16.mxu0 0
    %901 = vmatpush1.bf16.msra.mxu0 %v876
    %902 = vmatprep.subr.bf16.mxu0 0
    %903 = vmatpush1.bf16.msra.mxu0 %v875
    %904 = vmatprep.subr.bf16.mxu0 0
    %905 = vmatpush1.bf16.msra.mxu0 %v874
    %906 = vmatprep.subr.bf16.mxu0 0
    %907 = vmatpush2.bf16.msra.mxu0 0
    %908 = vmatprep.subr.bf16.mxu0 0
    %909 = vmatpush2.bf16.msra.mxu0 0
    %910 = vmatprep.subr.bf16.mxu0 0
    %911 = vmatpush2.bf16.msra.mxu0 0
    %912 = vmatprep.subr.bf16.mxu0 0
    %913 = vmatpush2.bf16.msra.mxu0 0
    %914 = vmatprep.subr.bf16.mxu0 0
    %915 = vmatpush2.bf16.msra.mxu0 0
    %916 = vmatprep.subr.bf16.mxu0 0
    %917 = vmatpush2.bf16.msra.mxu0 0
    %918 = vmatprep.subr.bf16.mxu0 0
    %919 = vmatpush2.bf16.msra.mxu0 0
    %920 = vmatprep.subr.bf16.mxu0 0
    %921 = vmatpush2.bf16.msra.mxu0 0
    %922 = vmatprep.mubr.bf16.mxu0 0
    %923 = vmatmul.mubr.bf16.gmra.mxu0 %v835
    %v924 = vpop.f32.mrf.mxu0
    %v925 = vadd.f32 %v840, %v924
    %v926 = vpop.f32.mrf.mxu0
    %v927 = vpop.f32.mrf.mxu0
    %v928 = vpop.f32.mrf.mxu0
    %929 = vdwg.mxu0
    %v930 = vmax.f32 %v925, 0.0
    %v931 = vld [vmem:[%s22] sm:$0xf]
    %v932 = vld [vmem:[%s22 + $0x4] sm:$0xf]
    %v933 = vld [vmem:[%s22 + $0x8] sm:$0xf]
    %v934 = vld [vmem:[%s22 + $0xc] sm:$0xf]
    %v935 = vld [vmem:[%s23] sm:$0x1]
    %v936 = vld [vmem:[%s24] sm:$0xff]
    %v937 = vld [vmem:[%s24 + $0x8] sm:$0x33]
    %v938 = vld [vmem:[%s25] sm:$0x3]
    %v939 = vpack.c.bf16 %v930, %v930
    %v941 = vlaneseq
    %v942 = vshrl.u32 %v941, 7
    %v943 = vsub.s32 0, %v942
    %v944 = vrot.slane %v935, %v943
    %v950 = vunpack.c.l.b16 %v931
    %v951 = vunpack.c.l.b16 %v932
    %v952 = vunpack.c.l.b16 %v933
    %v953 = vunpack.c.l.b16 %v934
    %v954 = vpack.c.b16 %v951, %v950
    %v955 = vpack.c.b16 %v953, %v952
    %v959 = vsel %vm253, %v939, 0
    %961 = vmatprep.subr.bf16.mxu0 0
    %962 = vmatpush1.bf16.msra.mxu0 0
    %963 = vmatprep.subr.bf16.mxu0 0
    %964 = vmatpush1.bf16.msra.mxu0 0
    %965 = vmatprep.subr.bf16.mxu0 0
    %966 = vmatpush1.bf16.msra.mxu0 0
    %967 = vmatprep.subr.bf16.mxu0 0
    %968 = vmatpush1.bf16.msra.mxu0 0
    %969 = vmatprep.subr.bf16.mxu0 0
    %970 = vmatpush1.bf16.msra.mxu0 0
    %971 = vmatprep.subr.bf16.mxu0 0
    %972 = vmatpush1.bf16.msra.mxu0 0
    %973 = vmatprep.subr.bf16.mxu0 0
    %974 = vmatpush1.bf16.msra.mxu0 %v955
    %975 = vmatprep.subr.bf16.mxu0 0
    %976 = vmatpush1.bf16.msra.mxu0 %v954
    %977 = vmatprep.subr.bf16.mxu0 0
    %978 = vmatpush2.bf16.msra.mxu0 0
    %979 = vmatprep.subr.bf16.mxu0 0
    %980 = vmatpush2.bf16.msra.mxu0 0
    %981 = vmatprep.subr.bf16.mxu0 0
    %982 = vmatpush2.bf16.msra.mxu0 0
    %983 = vmatprep.subr.bf16.mxu0 0
    %984 = vmatpush2.bf16.msra.mxu0 0
    %985 = vmatprep.subr.bf16.mxu0 0
    %986 = vmatpush2.bf16.msra.mxu0 0
    %987 = vmatprep.subr.bf16.mxu0 0
    %988 = vmatpush2.bf16.msra.mxu0 0
    %989 = vmatprep.subr.bf16.mxu0 0
    %990 = vmatpush2.bf16.msra.mxu0 0
    %991 = vmatprep.subr.bf16.mxu0 0
    %992 = vmatpush2.bf16.msra.mxu0 0
    %993 = vmatprep.mubr.bf16.mxu0 0
    %994 = vmatmul.mubr.bf16.gmra.mxu0 %v959
    %v995 = vpop.f32.mrf.mxu0
    %v996 = vadd.f32 %v944, %v995
    %v997 = vpop.f32.mrf.mxu0
    %v998 = vpop.f32.mrf.mxu0
    %v999 = vpop.f32.mrf.mxu0
    %1000 = vdwg.mxu0
    %v1001 = vpack.c.bf16 %v996, %v996
    %v1003 = vlaneseq
    %v1004 = vshrl.u32 %v1003, 7
    %v1005 = vsub.s32 0, %v1004
    %v1006 = vrot.slane %v938, %v1005
    %v1007 = vlaneseq
    %v1008 = vshrl.u32 %v1007, 7
    %v1009 = vsub.s32 1, %v1008
    %v1010 = vrot.slane %v938, %v1009
    %v1015 = vunpack.c.l.b16 %v936
    %v1016 = vunpack.c.h.b16 %v936
    %v1017 = vunpack.c.l.b16 %v937
    %v1018 = vunpack.c.h.b16 %v937
    %v1019 = vpack.c.b16 %v1017, %v1015
    %v1020 = vpack.c.b16 %v1018, %v1016
    %vm1021 = vcmask 97280
    %v1023 = vsel %vm1021, %v1001, 0
    %vm1025 = vcmask 1045504
    %v1027 = vsel %vm1025, %v1019, 0
    %v1030 = vsel %vm1025, %v1020, 0
    %1032 = vmatprep.subr.bf16.mxu0 0
    %1033 = vmatpush1.bf16.msra.mxu0 0
    %1034 = vmatprep.subr.bf16.mxu0 0
    %1035 = vmatpush1.bf16.msra.mxu0 0
    %1036 = vmatprep.subr.bf16.mxu0 0
    %1037 = vmatpush1.bf16.msra.mxu0 0
    %1038 = vmatprep.subr.bf16.mxu0 0
    %1039 = vmatpush1.bf16.msra.mxu0 0
    %1040 = vmatprep.subr.bf16.mxu0 0
    %1041 = vmatpush1.bf16.msra.mxu0 0
    %1042 = vmatprep.subr.bf16.mxu0 0
    %1043 = vmatpush1.bf16.msra.mxu0 0
    %1044 = vmatprep.subr.bf16.mxu0 0
    %1045 = vmatpush1.bf16.msra.mxu0 0
    %1046 = vmatprep.subr.bf16.mxu0 %v1030
    %1047 = vmatpush1.bf16.msra.mxu0 %v1027
    %1048 = vmatprep.subr.bf16.mxu0 0
    %1049 = vmatpush2.bf16.msra.mxu0 0
    %1050 = vmatprep.subr.bf16.mxu0 0
    %1051 = vmatpush2.bf16.msra.mxu0 0
    %1052 = vmatprep.subr.bf16.mxu0 0
    %1053 = vmatpush2.bf16.msra.mxu0 0
    %1054 = vmatprep.subr.bf16.mxu0 0
    %1055 = vmatpush2.bf16.msra.mxu0 0
    %1056 = vmatprep.subr.bf16.mxu0 0
    %1057 = vmatpush2.bf16.msra.mxu0 0
    %1058 = vmatprep.subr.bf16.mxu0 0
    %1059 = vmatpush2.bf16.msra.mxu0 0
    %1060 = vmatprep.subr.bf16.mxu0 0
    %1061 = vmatpush2.bf16.msra.mxu0 0
    %1062 = vmatprep.subr.bf16.mxu0 0
    %1063 = vmatpush2.bf16.msra.mxu0 0
    %1064 = vmatprep.mubr.bf16.mxu0 0
    %1065 = vmatmul.mubr.bf16.gmra.mxu0 %v1023
    %v1066 = vpop.f32.mrf.mxu0
    %v1067 = vadd.f32 %v1006, %v1066
    %v1068 = vpop.f32.mrf.mxu0
    %v1069 = vadd.f32 %v1010, %v1068
    %v1070 = vpop.f32.mrf.mxu0
    %v1071 = vpop.f32.mrf.mxu0
    %1072 = vdwg.mxu0
    %v1073 = vmul.f32 %v1067, %v113
    %v1074 = vadd.f32 %v815, %v1073
    %v1075 = vmul.f32 %v1069, %v112
    %v1076 = vsub.f32 %v817, %v1075
    %1077 = vst [vmem:[#allocation7] sm:$0xff] %v1074
    %1078 = vst [vmem:[#allocation8] sm:$0xff] %v1076
    // Predicated region
    $region114: #{tpu_custom_call.1} parent=1 // pred_check
      _
    $region115: #{tpu_custom_call.1} parent=1 // pred_check_branch
      %1080 = sbr.rel (0) target = $region117
    $region116: #{tpu_custom_call.1} parent=1 // pred_region
      %s1082 = ssub.s32 128, 128
      %1083 = vsyncadd [#allocation4], %s1082
      %s1085 = sshll.u32 [#allocation7], 4
      %s1086 = int_to_ptr.vmem [resolvable:$true] %s1085
      %1088 = dma.vmem_to_hbm [thread:$0]  %s1086, 128, %s26, [#allocation4]
    $region117: #{tpu_custom_call.1} parent=1 // pred_fallthru
      _
    // Predicated region
    $region118: #{tpu_custom_call.1} parent=1 // pred_check
      _
    $region119: #{tpu_custom_call.1} parent=1 // pred_check_branch
      %1090 = sbr.rel (0) target = $region121
    $region120: #{tpu_custom_call.1} parent=1 // pred_region
      %s1092 = ssub.s32 128, 128
      %1093 = vsyncadd [#allocation9], %s1092
      %s1095 = sshll.u32 [#allocation8], 4
      %s1096 = int_to_ptr.vmem [resolvable:$true] %s1095
      %1098 = dma.vmem_to_hbm [thread:$0]  %s1096, 128, %s27, [#allocation9]
    $region121: #{tpu_custom_call.1} parent=1 // pred_fallthru
      _
    // Predicated region
    $region122: #{tpu_custom_call.1} parent=1 // pred_check
      _
    $region123: #{tpu_custom_call.1} parent=1 // pred_check_branch
      %1100 = sbr.rel (0) target = $region125
    $region124: #{tpu_custom_call.1} parent=1 // pred_region
      %1101 = dma.done [#allocation4], 128
    $region125: #{tpu_custom_call.1} parent=1 // pred_fallthru
      _
    // Predicated region
    $region126: #{tpu_custom_call.1} parent=1 // pred_check
      _
    $region127: #{tpu_custom_call.1} parent=1 // pred_check_branch
      %1103 = sbr.rel (0) target = $region129
    $region128: #{tpu_custom_call.1} parent=1 // pred_region
      %1104 = dma.done [#allocation9], 128
    $region129: #{tpu_custom_call.1} parent=1 // pred_fallthru
      _
    %1105 = vsyncpa [#allocation3], 1
    %1106 = vsyncpa [#allocation6], 1
    %1107 = vsyncpa [#allocation4], 1
    %1108 = vsyncpa [#allocation9], 1

</llo_original>
